<compile_context>
chip_gen: v7x
topology: tpu7x:2x2x1
jax: 0.10.0
libtpu: 0.0.40
codegen_flags: <defaults>
</compile_context>

<pallas_src>
import numpy as np
import jax
import jax.numpy as jnp
from jax import lax
from jax.experimental import pallas as pl
from jax.experimental.pallas import tpu as pltpu

# ----------------------------- config (args) ---------------------------------
NUM_RELS = 5
REL_DIM = 16                        # args.rgcn_hidden_size  (D)
RNN_HIDDEN = 32                     # args.rnn_hidden_size   (H); 4H = 128 lanes
RNN_LAYERS = 1                      # args.rnn_layers
BIDIRECTIONAL = False               # args.rnn_bidirectional
NUM_DIRS = 2 if BIDIRECTIONAL else 1
RNN_OPT_DIM = RNN_HIDDEN * NUM_DIRS  # E
INPUT_DIM = REL_DIM * 2             # LSTM input size (I)

MAX_SAMPLES_PER_BLOCK = 32          # Bblk cap (multiple of 8)


# ------------------------------ fused kernel ----------------------------------
def path_block_kernel(x_ref, lens_ref, counts_ref, q_ref,
                      wih_ref, whh_ref, b_ref,
                      wqk_ref, wv_ref, wo_ref,
                      bqk_ref, bv_ref, bo_ref, pad_ref,
                      out_ref, gx_ref):
    """One grid step == one block of Bblk samples: LSTM + attention epilogue.

    x_ref:      (T*Bblk*P, I)  bf16, rows ordered [t][b_local][p]
    lens_ref:   (Bblk*P, 1)    int32 true path lengths (0 => padded path slot)
    counts_ref: (Bblk, 1)      int32 number of real paths per sample
    q_ref:      (Bblk, E)      f32 node_opt queries
    gx_ref:     (T*Bblk*P, 4H) f32 VMEM scratch (hoisted input projection)
    out_ref:    (Bblk, E)      f32
    """
    TBP = x_ref.shape[0]
    BP = lens_ref.shape[0]
    T = TBP // BP
    H = whh_ref.shape[0]
    E = wv_ref.shape[0]
    Bblk = counts_ref.shape[0]
    P = BP // Bblk

    # ---- LSTM: hoisted input projection (one big bf16 MXU matmul), staged
    # through VMEM so the unrolled recurrence only keeps one t-slice live. ----
    gx_ref[...] = jnp.dot(x_ref[...], wih_ref[...],
                          preferred_element_type=jnp.float32) + b_ref[...]

    lens = lens_ref[...]                                   # (BP, 1) int32
    whh = whh_ref[...]                                     # (H, 4H) bf16

    def step(t, carry):
        h, c = carry
        row0 = pl.multiple_of(t * BP, BP)
        gates = gx_ref[pl.ds(row0, BP), :] + jnp.dot(
            h.astype(whh.dtype), whh, preferred_element_type=jnp.float32)   # (BP, 4H)
        sg = jax.nn.sigmoid(gates)                         # one 128-lane EUP pass
        i_g = sg[:, 0 * H:1 * H]
        f_g = sg[:, 1 * H:2 * H]
        o_g = sg[:, 3 * H:4 * H]
        g_g = jnp.tanh(gates[:, 2 * H:3 * H])
        c_new = f_g * c + i_g * g_g
        h_new = o_g * jnp.tanh(c_new)
        valid = lens > t                                   # freeze == packed-seq last output
        return jnp.where(valid, h_new, h), jnp.where(valid, c_new, c)

    zeros = jnp.zeros((BP, H), jnp.float32)
    h, _ = lax.fori_loop(0, T, step, (zeros, zeros), unroll=True)

    # ---- attention epilogue (nn.MultiheadAttention, num_heads=1), batched ----
    counts = counts_ref[...]                               # (Bblk, 1) int32
    # query pre-multiplied by (W_q W_k^T * scale) on the host -> one tiny matmul
    qk = jnp.dot(q_ref[...], wqk_ref[...],
                 preferred_element_type=jnp.float32) + bqk_ref[...]          # (Bblk, E)
    v = jnp.dot(h.astype(wv_ref.dtype), wv_ref[...],
                preferred_element_type=jnp.float32) + bv_ref[...]            # (BP, E)

    # scores[b, r] = qk[b] . h[r]; only rows r of sample b survive the mask.
    s = jnp.einsum('be,re->br', qk, h,
                   preferred_element_type=jnp.float32)                       # (Bblk, BP)
    row_id = lax.broadcasted_iota(jnp.int32, (Bblk, BP), 0)
    col_id = lax.broadcasted_iota(jnp.int32, (Bblk, BP), 1)
    start = row_id * P
    in_sample = (col_id >= start) & (col_id < start + counts)
    s = jnp.where(in_sample, s, -1e30)
    m = jnp.max(s, axis=-1, keepdims=True)
    e = jnp.exp(s - m)
    w = e * pl.reciprocal(jnp.sum(e, axis=-1, keepdims=True), approx=True)   # (Bblk, BP)
    ctx = jnp.dot(w, v, preferred_element_type=jnp.float32)                  # (Bblk, E)
    attn = jnp.dot(ctx.astype(wo_ref.dtype), wo_ref[...],
                   preferred_element_type=jnp.float32) + bo_ref[...]         # (Bblk, E)

    # zero-path samples (and batch padding) -> pad_path_embed, one slab store.
    out_ref[...] = jnp.where(counts > 0, attn, pad_ref[...])


# ------------------------------ kernel wrapper --------------------------------
def run_path_model(x, lens, counts, q, params, *, bblk, T, P):
    H, E, I = RNN_HIDDEN, RNN_OPT_DIM, INPUT_DIM
    G = 4 * H
    BP = bblk * P
    TBP = T * BP
    Bp = counts.shape[0]
    nblk = Bp // bblk

    # Fold W_q @ W_k^T (+ b_q @ W_k^T) and the 1/sqrt(E) scale on the host;
    # the q'.b_k term is constant across paths and cancels in the softmax.
    scale = 1.0 / float(E) ** 0.5
    wqk = (jnp.dot(params['wq'], params['wk'].T) * scale).astype(jnp.float32)
    bqk = (jnp.dot(params['bq'], params['wk'].T) * scale).astype(jnp.float32)

    wih = params['wih'].astype(jnp.bfloat16)
    whh = params['whh'].astype(jnp.bfloat16)
    wv = params['wv'].astype(jnp.bfloat16)
    wo = params['wo'].astype(jnp.bfloat16)

    blk = lambda i: (i, 0)
    rep = lambda i: (0, 0)

    grid_spec = pltpu.PrefetchScalarGridSpec(
        num_scalar_prefetch=0,
        grid=(nblk,),
        in_specs=[
            pl.BlockSpec((TBP, I), blk),     # x (bf16)
            pl.BlockSpec((BP, 1), blk),      # path lengths
            pl.BlockSpec((bblk, 1), blk),    # path counts
            pl.BlockSpec((bblk, E), blk),    # queries
            pl.BlockSpec((I, G), rep),       # W_ih (bf16)
            pl.BlockSpec((H, G), rep),       # W_hh (bf16)
            pl.BlockSpec((1, G), rep),       # bias (b_ih + b_hh)
            pl.BlockSpec((E, E), rep),       # W_q @ W_k^T * scale
            pl.BlockSpec((E, E), rep),       # W_v (bf16)
            pl.BlockSpec((E, E), rep),       # W_o (bf16)
            pl.BlockSpec((1, E), rep),       # b_q @ W_k^T * scale
            pl.BlockSpec((1, E), rep),       # b_v
            pl.BlockSpec((1, E), rep),       # b_o
            pl.BlockSpec((1, E), rep),       # pad_path_embed
        ],
        out_specs=pl.BlockSpec((bblk, E), blk),
        scratch_shapes=[pltpu.VMEM((TBP, G), jnp.float32)],
    )

    # Advisory cost estimate so XLA can overlap surrounding gathers.
    flops = nblk * (2 * TBP * I * G + T * 2 * BP * H * G
                    + 2 * BP * E * E + 2 * bblk * E * E
                    + 4 * bblk * BP * E + 2 * bblk * E * E)
    transcendentals = nblk * (T * BP * 6 * H + bblk * BP + bblk)
    bytes_accessed = int(x.size * 2 + lens.size * 4 + counts.size * 4 + q.size * 4
                         + (wih.size + whh.size + wv.size + wo.size) * 2
                         + (wqk.size + bqk.size) * 4 + G * 4 + 3 * E * 4 + E * 4
                         + Bp * E * 4)

    out = pl.pallas_call(
        path_block_kernel,
        out_shape=jax.ShapeDtypeStruct((Bp, E), jnp.float32),
        grid_spec=grid_spec,
        compiler_params=pltpu.CompilerParams(dimension_semantics=("parallel",)),
        cost_estimate=pl.CostEstimate(flops=int(flops),
                                      transcendentals=int(transcendentals),
                                      bytes_accessed=bytes_accessed),
    )(x, lens, counts, q,
      wih, whh, params['b'],
      wqk, wv, wo,
      bqk, params['bv'], params['bo'],
      params['pad_path_embed'])
    return out                                             # (Bp, E)


# ------------------------------ parameters ------------------------------------
def init_params(key):
    ks = jax.random.split(key, 12)
    relu_gain = float(np.sqrt(2.0))

    def xavier(k, shape, gain):
        fan_out, fan_in = shape[0], shape[1]
        bound = gain * (6.0 / (fan_in + fan_out)) ** 0.5
        return jax.random.uniform(k, shape, jnp.float32, -bound, bound)

    s = 1.0 / float(RNN_HIDDEN) ** 0.5
    E = RNN_OPT_DIM
    xb = (6.0 / (E + E)) ** 0.5
    return {
        'rel_embeds': xavier(ks[0], (NUM_RELS * 2, REL_DIM), relu_gain),
        'pad_path_embed': xavier(ks[1], (1, E), relu_gain),
        # LSTM weights stored in x @ W orientation; bias = b_ih + b_hh.
        'wih': jax.random.uniform(ks[2], (INPUT_DIM, 4 * RNN_HIDDEN), jnp.float32, -s, s),
        'whh': jax.random.uniform(ks[3], (RNN_HIDDEN, 4 * RNN_HIDDEN), jnp.float32, -s, s),
        'b': (jax.random.uniform(ks[4], (1, 4 * RNN_HIDDEN), jnp.float32, -s, s)
              + jax.random.uniform(ks[5], (1, 4 * RNN_HIDDEN), jnp.float32, -s, s)),
        # MultiheadAttention (1 head) in/out projections.
        'wq': jax.random.uniform(ks[6], (E, E), jnp.float32, -xb, xb),
        'wk': jax.random.uniform(ks[7], (E, E), jnp.float32, -xb, xb),
        'wv': jax.random.uniform(ks[8], (E, E), jnp.float32, -xb, xb),
        'wo': jax.random.uniform(ks[9], (E, E), jnp.float32, -xb, xb),
        'bq': jnp.zeros((1, E), jnp.float32),
        'bk': jnp.zeros((1, E), jnp.float32),
        'bv': jnp.zeros((1, E), jnp.float32),
        'bo': jnp.zeros((1, E), jnp.float32),
    }


# ------------------------------ forward glue -----------------------------------
def _round_up(v, m):
    return ((v + m - 1) // m) * m


def _cdiv(a, b):
    return -(-a // b)


def _choose_blocking(B):
    """Samples per grid step (multiple of 8, <=32) and number of grid steps."""
    if B <= 1:
        return 8, 1
    bblk = min(MAX_SAMPLES_PER_BLOCK, _round_up(_cdiv(B, 2), 8))
    nblk = _cdiv(B, bblk)
    if nblk == 1:
        nblk = 2                     # v7x: keep both TensorCores busy
    elif nblk % 2:
        nblk += 1                    # balanced even grid for megacore sharding
    return bblk, nblk


def _build_index_tensors(paths_list, paths_len_list):
    """Host-side numpy ragged->dense index construction (no per-path XLA ops)."""
    B = len(paths_len_list)
    counts = np.asarray(paths_len_list, np.int32)
    max_paths = int(counts.max()) if B > 0 else 0
    P = max(8, _round_up(max(max_paths, 1), 8))            # sublane-aligned path padding
    T = 1
    for path in paths_list:
        T = max(T, len(path))

    node_ids = np.zeros((B, P, T), np.int32)
    rel_ids = np.zeros((B, P, T), np.int32)
    rel_valid = np.zeros((B, P, T), np.float32)
    step_valid = np.zeros((B, P, T), np.float32)
    lengths = np.zeros((B, P), np.int32)

    start = 0
    for b, n in enumerate(paths_len_list):
        for p, path in enumerate(paths_list[start:start + n]):
            lengths[b, p] = len(path)
            for t, (node_id, rel) in enumerate(path):
                node_ids[b, p, t] = node_id
                step_valid[b, p, t] = 1.0
                if rel != 'Padr':                          # 'Padr' -> zero rel vector (F.pad)
                    rel_ids[b, p, t] = rel
                    rel_valid[b, p, t] = 1.0
        start += n
    return counts, node_ids, rel_ids, rel_valid, step_valid, lengths, P, T


def path_model_forward(params, graph_embed, paths_list, paths_len_list, node_opt):
    assert len(graph_embed) == len(paths_len_list)
    B = len(paths_len_list)
    (counts_np, node_ids, rel_ids, rel_valid,
     step_valid, lengths, P, T) = _build_index_tensors(paths_list, paths_len_list)
    bblk, nblk = _choose_blocking(B)
    Bp = bblk * nblk

    # Vectorized gather/pad: one gather per sample's graph (per-sample graphs),
    # one gather for rel embeddings, one concat -- no per-path .at[].set chains.
    node_vecs = jnp.stack(
        [jnp.asarray(g)[jnp.asarray(node_ids[b])] for b, g in enumerate(graph_embed)],
        axis=0)                                                               # (B,P,T,D)
    rel_vecs = params['rel_embeds'][jnp.asarray(rel_ids)] * jnp.asarray(rel_valid)[..., None]
    x = jnp.concatenate([node_vecs, rel_vecs], axis=-1) * jnp.asarray(step_valid)[..., None]
    if Bp > B:
        x = jnp.concatenate([x, jnp.zeros((Bp - B,) + x.shape[1:], x.dtype)], axis=0)
    # Per-block row order (t, b_local, p): the block's LSTM state is one
    # (Bblk*P, H) stack and the hoisted projection is one big matmul.
    x = x.reshape(nblk, bblk, P, T, INPUT_DIM).transpose(0, 3, 1, 2, 4)
    x = x.reshape(nblk * T * bblk * P, INPUT_DIM).astype(jnp.bfloat16)

    lens_np = np.zeros((Bp, P), np.int32)
    lens_np[:B] = lengths
    lens = jnp.asarray(lens_np.reshape(Bp * P, 1))

    counts_full = np.zeros((Bp, 1), np.int32)
    counts_full[:B, 0] = counts_np
    counts = jnp.asarray(counts_full)

    q = jnp.stack([jnp.asarray(v, jnp.float32).reshape(RNN_OPT_DIM) for v in node_opt],
                  axis=0)                                                     # (B,E)
    if Bp > B:
        q = jnp.concatenate([q, jnp.zeros((Bp - B, RNN_OPT_DIM), jnp.float32)], axis=0)

    out = run_path_model(x, lens, counts, q, params, bblk=bblk, T=T, P=P)     # (Bp,E)
    return out[:B]                                                            # (B, E)


# ------------------------------------ main -------------------------------------
if __name__ == "__main__":
    key = jax.random.PRNGKey(0)
    kp, kg0, kg1, kg2, kn = jax.random.split(key, 5)
    params = init_params(kp)

    num_nodes = 6
    graph_embed = [
        jax.random.normal(kg0, (num_nodes, REL_DIM), jnp.float32),
        jax.random.normal(kg1, (num_nodes, REL_DIM), jnp.float32),
        jax.random.normal(kg2, (num_nodes, REL_DIM), jnp.float32),
    ]
    node_opt_mat = jax.random.normal(kn, (3, RNN_OPT_DIM), jnp.float32)
    node_opt = [node_opt_mat[i] for i in range(3)]

    # Flat list of paths; each item is (node_id, rel) with rel an int or 'Padr'.
    paths_list = [
        [(0, 1), (2, 'Padr')],                    # sample 0, path 0 (len 2)
        [(1, 3), (3, 4), (5, 'Padr')],            # sample 0, path 1 (len 3)
        [(0, 2)],                                 # sample 1, path 0 (len 1)
        [(4, 0), (1, 'Padr')],                    # sample 1, path 1 (len 2)
        [(2, 5), (3, 7), (0, 'Padr')],            # sample 1, path 2 (len 3)
    ]
    paths_len_list = [2, 3, 0]                    # sample 2 has no paths -> pad_path_embed

    out = path_model_forward(params, graph_embed, paths_list, paths_len_list, node_opt)
    out = jax.block_until_ready(out)
    assert out.shape == (len(paths_len_list), RNN_OPT_DIM)
    assert bool(jnp.all(jnp.isfinite(out)))
    # Zero-path sample must return pad_path_embed exactly.
    assert bool(jnp.allclose(out[2], params['pad_path_embed'][0]))
    print("KERNEL_OK")
</pallas_src>

<mosaic_0001>
module attributes {stable_mosaic.version = 11 : i64} {
  func.func @path_block_kernel(%arg0: i32, %arg1: memref<192x32xbf16, #tpu.memory_space<vmem>>, %arg2: memref<64x1xi32, #tpu.memory_space<vmem>>, %arg3: memref<8x1xi32, #tpu.memory_space<vmem>>, %arg4: memref<8x32xf32, #tpu.memory_space<vmem>>, %arg5: memref<32x128xbf16, #tpu.memory_space<vmem>>, %arg6: memref<32x128xbf16, #tpu.memory_space<vmem>>, %arg7: memref<1x128xf32, #tpu.memory_space<vmem>>, %arg8: memref<32x32xf32, #tpu.memory_space<vmem>>, %arg9: memref<32x32xbf16, #tpu.memory_space<vmem>>, %arg10: memref<32x32xbf16, #tpu.memory_space<vmem>>, %arg11: memref<1x32xf32, #tpu.memory_space<vmem>>, %arg12: memref<1x32xf32, #tpu.memory_space<vmem>>, %arg13: memref<1x32xf32, #tpu.memory_space<vmem>>, %arg14: memref<1x32xf32, #tpu.memory_space<vmem>>, %arg15: memref<8x32xf32, #tpu.memory_space<vmem>>, %arg16: memref<192x128xf32, #tpu.memory_space<vmem>>) attributes {dimension_semantics = [#tpu.dimension_semantics<parallel>], iteration_bounds = array<i64: 2>, scalar_prefetch = 0 : i64, scratch_operands = 1 : i64, tpu.core_type = #tpu.core_type<tc>, window_params = [{transform_indices = @transform_0, window_bounds = array<i64: 192, 32>}, {transform_indices = @transform_1, window_bounds = array<i64: 64, 1>}, {transform_indices = @transform_2, window_bounds = array<i64: 8, 1>}, {transform_indices = @transform_3, window_bounds = array<i64: 8, 32>}, {pipeline_mode = #tpu.pipeline_mode<synchronous>, transform_indices = @transform_4, window_bounds = array<i64: 32, 128>}, {pipeline_mode = #tpu.pipeline_mode<synchronous>, transform_indices = @transform_5, window_bounds = array<i64: 32, 128>}, {pipeline_mode = #tpu.pipeline_mode<synchronous>, transform_indices = @transform_6, window_bounds = array<i64: 1, 128>}, {pipeline_mode = #tpu.pipeline_mode<synchronous>, transform_indices = @transform_7, window_bounds = array<i64: 32, 32>}, {pipeline_mode = #tpu.pipeline_mode<synchronous>, transform_indices = @transform_8, window_bounds = array<i64: 32, 32>}, {pipeline_mode = #tpu.pipeline_mode<synchronous>, transform_indices = @transform_9, window_bounds = array<i64: 32, 32>}, {pipeline_mode = #tpu.pipeline_mode<synchronous>, transform_indices = @transform_10, window_bounds = array<i64: 1, 32>}, {pipeline_mode = #tpu.pipeline_mode<synchronous>, transform_indices = @transform_11, window_bounds = array<i64: 1, 32>}, {pipeline_mode = #tpu.pipeline_mode<synchronous>, transform_indices = @transform_12, window_bounds = array<i64: 1, 32>}, {pipeline_mode = #tpu.pipeline_mode<synchronous>, transform_indices = @transform_13, window_bounds = array<i64: 1, 32>}, {transform_indices = @transform_14, window_bounds = array<i64: 8, 32>}]} {
    %c0 = arith.constant 0 : index
    %c0_0 = arith.constant 0 : index
    %0 = vector.load %arg1[%c0, %c0_0] : memref<192x32xbf16, #tpu.memory_space<vmem>>, vector<192x32xbf16>
    %c0_1 = arith.constant 0 : index
    %c0_2 = arith.constant 0 : index
    %1 = vector.load %arg5[%c0_1, %c0_2] : memref<32x128xbf16, #tpu.memory_space<vmem>>, vector<32x128xbf16>
    %cst = arith.constant dense<0.000000e+00> : vector<192x128xf32>
    %2 = tpu.matmul %0, %1, %cst {dimension_numbers = #tpu.dot_dimension_numbers<[1], [0], [0], [1], [0, 0, 1, 1], [], []>} : vector<192x32xbf16>, vector<32x128xbf16>, vector<192x128xf32> -> vector<192x128xf32>
    %c0_3 = arith.constant 0 : index
    %c0_4 = arith.constant 0 : index
    %3 = vector.load %arg7[%c0_3, %c0_4] : memref<1x128xf32, #tpu.memory_space<vmem>>, vector<1x128xf32>
    %4 = vector.broadcast %3 : vector<1x128xf32> to vector<192x128xf32>
    %5 = arith.addf %2, %4 : vector<192x128xf32>
    %c0_5 = arith.constant 0 : index
    %c0_6 = arith.constant 0 : index
    %6 = vector.load %arg16[%c0_5, %c0_6] : memref<192x128xf32, #tpu.memory_space<vmem>>, vector<192x128xf32>
    tpu.vector_store %arg16[%c0_5, %c0_6], %5 {strides = array<i32>} : memref<192x128xf32, #tpu.memory_space<vmem>>, vector<192x128xf32>,
    %c0_7 = arith.constant 0 : index
    %c0_8 = arith.constant 0 : index
    %7 = vector.load %arg2[%c0_7, %c0_8] : memref<64x1xi32, #tpu.memory_space<vmem>>, vector<64x1xi32>
    %c0_9 = arith.constant 0 : index
    %c0_10 = arith.constant 0 : index
    %8 = vector.load %arg6[%c0_9, %c0_10] : memref<32x128xbf16, #tpu.memory_space<vmem>>, vector<32x128xbf16>
    %cst_11 = arith.constant 0.000000e+00 : f32
    %9 = vector.broadcast %cst_11 : f32 to vector<64x32xf32>
    %c0_i32 = arith.constant 0 : i32
    %c64_i32 = arith.constant 64 : i32
    %10 = arith.muli %c0_i32, %c64_i32 : i32
    %11 = tpu.assume_multiple %10, 64 : i32
    %12 = arith.index_cast %11 : i32 to index
    %c0_12 = arith.constant 0 : index
    %13 = vector.load %arg16[%12, %c0_12] : memref<192x128xf32, #tpu.memory_space<vmem>>, vector<64x128xf32>
    %14 = arith.truncf %9 : vector<64x32xf32> to vector<64x32xbf16>
    %cst_13 = arith.constant dense<0.000000e+00> : vector<64x128xf32>
    %15 = tpu.matmul %14, %8, %cst_13 {dimension_numbers = #tpu.dot_dimension_numbers<[1], [0], [0], [1], [0, 0, 1, 1], [], []>} : vector<64x32xbf16>, vector<32x128xbf16>, vector<64x128xf32> -> vector<64x128xf32>
    %16 = arith.addf %13, %15 : vector<64x128xf32>
    %17 = arith.negf %16 : vector<64x128xf32>
    %18 = math.exp %17 : vector<64x128xf32>
    %cst_14 = arith.constant 1.000000e+00 : f32
    %19 = vector.broadcast %cst_14 : f32 to vector<64x128xf32>
    %20 = arith.addf %19, %18 : vector<64x128xf32>
    %21 = arith.divf %19, %20 : vector<64x128xf32>
    %22 = vector.extract_strided_slice %21 {offsets = [0, 0], sizes = [64, 32], strides = [1, 1]} : vector<64x128xf32> to vector<64x32xf32>
    %23 = vector.extract_strided_slice %21 {offsets = [0, 32], sizes = [64, 32], strides = [1, 1]} : vector<64x128xf32> to vector<64x32xf32>
    %24 = vector.extract_strided_slice %21 {offsets = [0, 96], sizes = [64, 32], strides = [1, 1]} : vector<64x128xf32> to vector<64x32xf32>
    %25 = vector.extract_strided_slice %16 {offsets = [0, 64], sizes = [64, 32], strides = [1, 1]} : vector<64x128xf32> to vector<64x32xf32>
    %26 = math.tanh %25 : vector<64x32xf32>
    %27 = arith.mulf %23, %9 : vector<64x32xf32>
    %28 = arith.mulf %22, %26 : vector<64x32xf32>
    %29 = arith.addf %27, %28 : vector<64x32xf32>
    %30 = math.tanh %29 : vector<64x32xf32>
    %31 = arith.mulf %24, %30 : vector<64x32xf32>
    %32 = vector.broadcast %c0_i32 : i32 to vector<64x1xi32>
    %33 = arith.cmpi sgt, %7, %32 : vector<64x1xi32>
    %34 = vector.shape_cast %33 : vector<64x1xi1> to vector<64x1xi1>
    %35 = vector.broadcast %34 : vector<64x1xi1> to vector<64x32xi1>
    %36 = arith.select %35, %31, %9 : vector<64x32xi1>, vector<64x32xf32>
    %37 = vector.shape_cast %33 : vector<64x1xi1> to vector<64x1xi1>
    %38 = vector.broadcast %37 : vector<64x1xi1> to vector<64x32xi1>
    %39 = arith.select %38, %29, %9 : vector<64x32xi1>, vector<64x32xf32>
    %c1_i32 = arith.constant 1 : i32
    %c64_i32_15 = arith.constant 64 : i32
    %40 = arith.muli %c1_i32, %c64_i32_15 : i32
    %41 = tpu.assume_multiple %40, 64 : i32
    %42 = arith.index_cast %41 : i32 to index
    %c0_16 = arith.constant 0 : index
    %43 = vector.load %arg16[%42, %c0_16] : memref<192x128xf32, #tpu.memory_space<vmem>>, vector<64x128xf32>
    %44 = arith.truncf %36 : vector<64x32xf32> to vector<64x32xbf16>
    %cst_17 = arith.constant dense<0.000000e+00> : vector<64x128xf32>
    %45 = tpu.matmul %44, %8, %cst_17 {dimension_numbers = #tpu.dot_dimension_numbers<[1], [0], [0], [1], [0, 0, 1, 1], [], []>} : vector<64x32xbf16>, vector<32x128xbf16>, vector<64x128xf32> -> vector<64x128xf32>
    %46 = arith.addf %43, %45 : vector<64x128xf32>
    %47 = arith.negf %46 : vector<64x128xf32>
    %48 = math.exp %47 : vector<64x128xf32>
    %cst_18 = arith.constant 1.000000e+00 : f32
    %49 = vector.broadcast %cst_18 : f32 to vector<64x128xf32>
    %50 = arith.addf %49, %48 : vector<64x128xf32>
    %51 = arith.divf %49, %50 : vector<64x128xf32>
    %52 = vector.extract_strided_slice %51 {offsets = [0, 0], sizes = [64, 32], strides = [1, 1]} : vector<64x128xf32> to vector<64x32xf32>
    %53 = vector.extract_strided_slice %51 {offsets = [0, 32], sizes = [64, 32], strides = [1, 1]} : vector<64x128xf32> to vector<64x32xf32>
    %54 = vector.extract_strided_slice %51 {offsets = [0, 96], sizes = [64, 32], strides = [1, 1]} : vector<64x128xf32> to vector<64x32xf32>
    %55 = vector.extract_strided_slice %46 {offsets = [0, 64], sizes = [64, 32], strides = [1, 1]} : vector<64x128xf32> to vector<64x32xf32>
    %56 = math.tanh %55 : vector<64x32xf32>
    %57 = arith.mulf %53, %39 : vector<64x32xf32>
    %58 = arith.mulf %52, %56 : vector<64x32xf32>
    %59 = arith.addf %57, %58 : vector<64x32xf32>
    %60 = math.tanh %59 : vector<64x32xf32>
    %61 = arith.mulf %54, %60 : vector<64x32xf32>
    %62 = vector.broadcast %c1_i32 : i32 to vector<64x1xi32>
    %63 = arith.cmpi sgt, %7, %62 : vector<64x1xi32>
    %64 = vector.shape_cast %63 : vector<64x1xi1> to vector<64x1xi1>
    %65 = vector.broadcast %64 : vector<64x1xi1> to vector<64x32xi1>
    %66 = arith.select %65, %61, %36 : vector<64x32xi1>, vector<64x32xf32>
    %67 = vector.shape_cast %63 : vector<64x1xi1> to vector<64x1xi1>
    %68 = vector.broadcast %67 : vector<64x1xi1> to vector<64x32xi1>
    %69 = arith.select %68, %59, %39 : vector<64x32xi1>, vector<64x32xf32>
    %c2_i32 = arith.constant 2 : i32
    %c64_i32_19 = arith.constant 64 : i32
    %70 = arith.muli %c2_i32, %c64_i32_19 : i32
    %71 = tpu.assume_multiple %70, 64 : i32
    %72 = arith.index_cast %71 : i32 to index
    %c0_20 = arith.constant 0 : index
    %73 = vector.load %arg16[%72, %c0_20] : memref<192x128xf32, #tpu.memory_space<vmem>>, vector<64x128xf32>
    %74 = arith.truncf %66 : vector<64x32xf32> to vector<64x32xbf16>
    %cst_21 = arith.constant dense<0.000000e+00> : vector<64x128xf32>
    %75 = tpu.matmul %74, %8, %cst_21 {dimension_numbers = #tpu.dot_dimension_numbers<[1], [0], [0], [1], [0, 0, 1, 1], [], []>} : vector<64x32xbf16>, vector<32x128xbf16>, vector<64x128xf32> -> vector<64x128xf32>
    %76 = arith.addf %73, %75 : vector<64x128xf32>
    %77 = arith.negf %76 : vector<64x128xf32>
    %78 = math.exp %77 : vector<64x128xf32>
    %cst_22 = arith.constant 1.000000e+00 : f32
    %79 = vector.broadcast %cst_22 : f32 to vector<64x128xf32>
    %80 = arith.addf %79, %78 : vector<64x128xf32>
    %81 = arith.divf %79, %80 : vector<64x128xf32>
    %82 = vector.extract_strided_slice %81 {offsets = [0, 0], sizes = [64, 32], strides = [1, 1]} : vector<64x128xf32> to vector<64x32xf32>
    %83 = vector.extract_strided_slice %81 {offsets = [0, 32], sizes = [64, 32], strides = [1, 1]} : vector<64x128xf32> to vector<64x32xf32>
    %84 = vector.extract_strided_slice %81 {offsets = [0, 96], sizes = [64, 32], strides = [1, 1]} : vector<64x128xf32> to vector<64x32xf32>
    %85 = vector.extract_strided_slice %76 {offsets = [0, 64], sizes = [64, 32], strides = [1, 1]} : vector<64x128xf32> to vector<64x32xf32>
    %86 = math.tanh %85 : vector<64x32xf32>
    %87 = arith.mulf %83, %69 : vector<64x32xf32>
    %88 = arith.mulf %82, %86 : vector<64x32xf32>
    %89 = arith.addf %87, %88 : vector<64x32xf32>
    %90 = math.tanh %89 : vector<64x32xf32>
    %91 = arith.mulf %84, %90 : vector<64x32xf32>
    %92 = vector.broadcast %c2_i32 : i32 to vector<64x1xi32>
    %93 = arith.cmpi sgt, %7, %92 : vector<64x1xi32>
    %94 = vector.shape_cast %93 : vector<64x1xi1> to vector<64x1xi1>
    %95 = vector.broadcast %94 : vector<64x1xi1> to vector<64x32xi1>
    %96 = arith.select %95, %91, %66 : vector<64x32xi1>, vector<64x32xf32>
    %97 = vector.shape_cast %93 : vector<64x1xi1> to vector<64x1xi1>
    %98 = vector.broadcast %97 : vector<64x1xi1> to vector<64x32xi1>
    %99 = arith.select %98, %89, %69 : vector<64x32xi1>, vector<64x32xf32>
    %c3_i32 = arith.constant 3 : i32
    %c0_23 = arith.constant 0 : index
    %c0_24 = arith.constant 0 : index
    %100 = vector.load %arg3[%c0_23, %c0_24] : memref<8x1xi32, #tpu.memory_space<vmem>>, vector<8x1xi32>
    %c0_25 = arith.constant 0 : index
    %c0_26 = arith.constant 0 : index
    %101 = vector.load %arg4[%c0_25, %c0_26] : memref<8x32xf32, #tpu.memory_space<vmem>>, vector<8x32xf32>
    %c0_27 = arith.constant 0 : index
    %c0_28 = arith.constant 0 : index
    %102 = vector.load %arg8[%c0_27, %c0_28] : memref<32x32xf32, #tpu.memory_space<vmem>>, vector<32x32xf32>
    %cst_29 = arith.constant dense<0.000000e+00> : vector<8x32xf32>
    %103 = tpu.matmul %101, %102, %cst_29 {dimension_numbers = #tpu.dot_dimension_numbers<[1], [0], [0], [1], [0, 0, 1, 1], [], []>} : vector<8x32xf32>, vector<32x32xf32>, vector<8x32xf32> -> vector<8x32xf32>
    %c0_30 = arith.constant 0 : index
    %c0_31 = arith.constant 0 : index
    %104 = vector.load %arg11[%c0_30, %c0_31] : memref<1x32xf32, #tpu.memory_space<vmem>>, vector<1x32xf32>
    %105 = vector.broadcast %104 : vector<1x32xf32> to vector<8x32xf32>
    %106 = arith.addf %103, %105 : vector<8x32xf32>
    %107 = arith.truncf %96 : vector<64x32xf32> to vector<64x32xbf16>
    %c0_32 = arith.constant 0 : index
    %c0_33 = arith.constant 0 : index
    %108 = vector.load %arg9[%c0_32, %c0_33] : memref<32x32xbf16, #tpu.memory_space<vmem>>, vector<32x32xbf16>
    %cst_34 = arith.constant dense<0.000000e+00> : vector<64x32xf32>
    %109 = tpu.matmul %107, %108, %cst_34 {dimension_numbers = #tpu.dot_dimension_numbers<[1], [0], [0], [1], [0, 0, 1, 1], [], []>} : vector<64x32xbf16>, vector<32x32xbf16>, vector<64x32xf32> -> vector<64x32xf32>
    %c0_35 = arith.constant 0 : index
    %c0_36 = arith.constant 0 : index
    %110 = vector.load %arg12[%c0_35, %c0_36] : memref<1x32xf32, #tpu.memory_space<vmem>>, vector<1x32xf32>
    %111 = vector.broadcast %110 : vector<1x32xf32> to vector<64x32xf32>
    %112 = arith.addf %109, %111 : vector<64x32xf32>
    "tpu.trace_start"() <{level = 10 : i32, message = "be,re->br"}> : () -> ()
    %cst_37 = arith.constant dense<0.000000e+00> : vector<8x64xf32>
    %113 = tpu.matmul %106, %96, %cst_37 {dimension_numbers = #tpu.dot_dimension_numbers<[1], [1], [0], [0], [0, 0, 1, 0], [], []>} : vector<8x32xf32>, vector<64x32xf32>, vector<8x64xf32> -> vector<8x64xf32>
    "tpu.trace_stop"() : () -> ()
    %114 = tpu.iota {dimensions = array<i32: 0>} : vector<8x64xi32>
    %115 = tpu.iota {dimensions = array<i32: 1>} : vector<8x64xi32>
    %c8_i32 = arith.constant 8 : i32
    %116 = vector.broadcast %c8_i32 : i32 to vector<8x64xi32>
    %117 = arith.muli %114, %116 : vector<8x64xi32>
    %118 = arith.cmpi sge, %115, %117 : vector<8x64xi32>
    %119 = vector.broadcast %100 : vector<8x1xi32> to vector<8x64xi32>
    %120 = arith.addi %117, %119 : vector<8x64xi32>
    %121 = arith.cmpi slt, %115, %120 : vector<8x64xi32>
    %122 = arith.andi %118, %121 : vector<8x64xi1>
    %cst_38 = arith.constant -1.000000e+30 : f32
    %123 = vector.broadcast %cst_38 : f32 to vector<8x64xf32>
    %124 = arith.select %122, %113, %123 : vector<8x64xi1>, vector<8x64xf32>
    %cst_39 = arith.constant dense<0xFF800000> : vector<8xf32>
    %125 = vector.multi_reduction <maximumf>, %124, %cst_39 [1] : vector<8x64xf32> to vector<8xf32>
    %126 = vector.shape_cast %125 : vector<8xf32> to vector<8x1xf32>
    %127 = vector.broadcast %126 : vector<8x1xf32> to vector<8x64xf32>
    %128 = arith.subf %124, %127 : vector<8x64xf32>
    %129 = math.exp %128 : vector<8x64xf32>
    %cst_40 = arith.constant dense<0.000000e+00> : vector<8xf32>
    %130 = vector.multi_reduction <add>, %129, %cst_40 [1] : vector<8x64xf32> to vector<8xf32>
    %131 = vector.shape_cast %130 : vector<8xf32> to vector<8x1xf32>
    %132 = tpu.reciprocal %131 {approx = true} : vector<8x1xf32> -> vector<8x1xf32>
    %133 = vector.broadcast %132 : vector<8x1xf32> to vector<8x64xf32>
    %134 = arith.mulf %129, %133 : vector<8x64xf32>
    %cst_41 = arith.constant dense<0.000000e+00> : vector<8x32xf32>
    %135 = tpu.matmul %134, %112, %cst_41 {dimension_numbers = #tpu.dot_dimension_numbers<[1], [0], [0], [1], [0, 0, 1, 1], [], []>} : vector<8x64xf32>, vector<64x32xf32>, vector<8x32xf32> -> vector<8x32xf32>
    %136 = arith.truncf %135 : vector<8x32xf32> to vector<8x32xbf16>
    %c0_42 = arith.constant 0 : index
    %c0_43 = arith.constant 0 : index
    %137 = vector.load %arg10[%c0_42, %c0_43] : memref<32x32xbf16, #tpu.memory_space<vmem>>, vector<32x32xbf16>
    %cst_44 = arith.constant dense<0.000000e+00> : vector<8x32xf32>
    %138 = tpu.matmul %136, %137, %cst_44 {dimension_numbers = #tpu.dot_dimension_numbers<[1], [0], [0], [1], [0, 0, 1, 1], [], []>} : vector<8x32xbf16>, vector<32x32xbf16>, vector<8x32xf32> -> vector<8x32xf32>
    %c0_45 = arith.constant 0 : index
    %c0_46 = arith.constant 0 : index
    %139 = vector.load %arg13[%c0_45, %c0_46] : memref<1x32xf32, #tpu.memory_space<vmem>>, vector<1x32xf32>
    %140 = vector.broadcast %139 : vector<1x32xf32> to vector<8x32xf32>
    %141 = arith.addf %138, %140 : vector<8x32xf32>
    %c0_i32_47 = arith.constant 0 : i32
    %142 = vector.broadcast %c0_i32_47 : i32 to vector<8x1xi32>
    %143 = arith.cmpi sgt, %100, %142 : vector<8x1xi32>
    %c0_48 = arith.constant 0 : index
    %c0_49 = arith.constant 0 : index
    %144 = vector.load %arg14[%c0_48, %c0_49] : memref<1x32xf32, #tpu.memory_space<vmem>>, vector<1x32xf32>
    %145 = vector.shape_cast %143 : vector<8x1xi1> to vector<8x1xi1>
    %146 = vector.broadcast %145 : vector<8x1xi1> to vector<8x32xi1>
    %147 = vector.shape_cast %144 : vector<1x32xf32> to vector<1x32xf32>
    %148 = vector.broadcast %147 : vector<1x32xf32> to vector<8x32xf32>
    %149 = arith.select %146, %141, %148 : vector<8x32xi1>, vector<8x32xf32>
    %c0_50 = arith.constant 0 : index
    %c0_51 = arith.constant 0 : index
    %150 = vector.load %arg15[%c0_50, %c0_51] : memref<8x32xf32, #tpu.memory_space<vmem>>, vector<8x32xf32>
    tpu.vector_store %arg15[%c0_50, %c0_51], %149 {strides = array<i32>} : memref<8x32xf32, #tpu.memory_space<vmem>>, vector<8x32xf32>,
    return
  }
  func.func @transform_0(%arg0: i32) -> (i32, i32) {
    %c0_i32 = arith.constant 0 : i32
    %c0_i32_0 = arith.constant 0 : i32
    return %arg0, %c0_i32 : i32, i32
  }
  func.func @transform_1(%arg0: i32) -> (i32, i32) {
    %c0_i32 = arith.constant 0 : i32
    %c0_i32_0 = arith.constant 0 : i32
    return %arg0, %c0_i32 : i32, i32
  }
  func.func @transform_2(%arg0: i32) -> (i32, i32) {
    %c0_i32 = arith.constant 0 : i32
    %c0_i32_0 = arith.constant 0 : i32
    return %arg0, %c0_i32 : i32, i32
  }
  func.func @transform_3(%arg0: i32) -> (i32, i32) {
    %c0_i32 = arith.constant 0 : i32
    %c0_i32_0 = arith.constant 0 : i32
    return %arg0, %c0_i32 : i32, i32
  }
  func.func @transform_4(%arg0: i32) -> (i32, i32) {
    %c0_i32 = arith.constant 0 : i32
    %c0_i32_0 = arith.constant 0 : i32
    %c0_i32_1 = arith.constant 0 : i32
    return %c0_i32, %c0_i32_0 : i32, i32
  }
  func.func @transform_5(%arg0: i32) -> (i32, i32) {
    %c0_i32 = arith.constant 0 : i32
    %c0_i32_0 = arith.constant 0 : i32
    %c0_i32_1 = arith.constant 0 : i32
    return %c0_i32, %c0_i32_0 : i32, i32
  }
  func.func @transform_6(%arg0: i32) -> (i32, i32) {
    %c0_i32 = arith.constant 0 : i32
    %c0_i32_0 = arith.constant 0 : i32
    %c0_i32_1 = arith.constant 0 : i32
    return %c0_i32, %c0_i32_0 : i32, i32
  }
  func.func @transform_7(%arg0: i32) -> (i32, i32) {
    %c0_i32 = arith.constant 0 : i32
    %c0_i32_0 = arith.constant 0 : i32
    %c0_i32_1 = arith.constant 0 : i32
    return %c0_i32, %c0_i32_0 : i32, i32
  }
  func.func @transform_8(%arg0: i32) -> (i32, i32) {
    %c0_i32 = arith.constant 0 : i32
    %c0_i32_0 = arith.constant 0 : i32
    %c0_i32_1 = arith.constant 0 : i32
    return %c0_i32, %c0_i32_0 : i32, i32
  }
  func.func @transform_9(%arg0: i32) -> (i32, i32) {
    %c0_i32 = arith.constant 0 : i32
    %c0_i32_0 = arith.constant 0 : i32
    %c0_i32_1 = arith.constant 0 : i32
    return %c0_i32, %c0_i32_0 : i32, i32
  }
  func.func @transform_10(%arg0: i32) -> (i32, i32) {
    %c0_i32 = arith.constant 0 : i32
    %c0_i32_0 = arith.constant 0 : i32
    %c0_i32_1 = arith.constant 0 : i32
    return %c0_i32, %c0_i32_0 : i32, i32
  }
  func.func @transform_11(%arg0: i32) -> (i32, i32) {
    %c0_i32 = arith.constant 0 : i32
    %c0_i32_0 = arith.constant 0 : i32
    %c0_i32_1 = arith.constant 0 : i32
    return %c0_i32, %c0_i32_0 : i32, i32
  }
  func.func @transform_12(%arg0: i32) -> (i32, i32) {
    %c0_i32 = arith.constant 0 : i32
    %c0_i32_0 = arith.constant 0 : i32
    %c0_i32_1 = arith.constant 0 : i32
    return %c0_i32, %c0_i32_0 : i32, i32
  }
  func.func @transform_13(%arg0: i32) -> (i32, i32) {
    %c0_i32 = arith.constant 0 : i32
    %c0_i32_0 = arith.constant 0 : i32
    %c0_i32_1 = arith.constant 0 : i32
    return %c0_i32, %c0_i32_0 : i32, i32
  }
  func.func @transform_14(%arg0: i32) -> (i32, i32) {
    %c0_i32 = arith.constant 0 : i32
    %c0_i32_0 = arith.constant 0 : i32
    return %arg0, %c0_i32 : i32, i32
  }
}

</mosaic_0001>

<llo_original>
// kernel: tpu_custom_call.1
$region0: #{tpu_custom_call.1}
  #allocation0 [shape = 'u32[]', space=smem, size = 0x4, offset = 0x4, fixed_abs, tag = 'smem constant byte address 0x4 - core index']
  #allocation1 [shape = 'u32[144,128]{1,0:T(1,128)}', space=vmem, size = 0x12000, scoped, tag = 'internal scratch']
  #allocation2 [shape = 'f32[192,128]{1,0:T(8,128)}', space=vmem, size = 0x18000, scoped, tag = 'scratch operand']
  %s0 = inlined_call_operand.vmem [shape: bf16[384,32], index: 0, kind: input, shape index: {}]
  %s1 = inlined_call_operand.vmem [shape: s32[128,1], index: 1, kind: input, shape index: {}]
  %s2 = inlined_call_operand.vmem [shape: s32[16,1], index: 2, kind: input, shape index: {}]
  %s3 = inlined_call_operand.vmem [shape: f32[16,32], index: 3, kind: input, shape index: {}]
  %s4 = inlined_call_operand.vmem [shape: bf16[32,128], index: 4, kind: input, shape index: {}]
  %s5 = inlined_call_operand.vmem [shape: bf16[32,128], index: 5, kind: input, shape index: {}]
  %s6 = inlined_call_operand.vmem [shape: f32[1,128], index: 6, kind: input, shape index: {}]
  %s7 = inlined_call_operand.vmem [shape: f32[32,32], index: 7, kind: input, shape index: {}]
  %s8 = inlined_call_operand.vmem [shape: bf16[32,32], index: 8, kind: input, shape index: {}]
  %s9 = inlined_call_operand.vmem [shape: bf16[32,32], index: 9, kind: input, shape index: {}]
  %s10 = inlined_call_operand.vmem [shape: f32[1,32], index: 10, kind: input, shape index: {}]
  %s11 = inlined_call_operand.vmem [shape: f32[1,32], index: 11, kind: input, shape index: {}]
  %s12 = inlined_call_operand.vmem [shape: f32[1,32], index: 12, kind: input, shape index: {}]
  %s13 = inlined_call_operand.vmem [shape: f32[1,32], index: 13, kind: input, shape index: {}]
  %s14 = inlined_call_operand.hbm [shape: f32[16,32], index: 14, kind: output, shape index: {}]
  %s15 = sld [smem:[#allocation0]]
  $region89: #{tpu_custom_call.1} parent=0
    _
  %s17 = ssub.s32 1, %s15
  %s18 = scalar_select 0, %s17, %s15
  $region1: #{tpu_custom_call.1} parent=0
    #allocation3 [shape = 'u8[8192]{0}', space=vmem, size = 0x2000, scoped, tag = 'output window, operand 0']
    #allocation4 [shape = 's32[2]{0}', space=sflag, size = 0x8, scoped, tag = 'scoped memory for tpu_custom_call.1']
    %19 = vsyncpa [#allocation4], 0
    %s20 = scalar_lea.sflag [#allocation4], 1
    %21 = vsyncpa %s20, 0
    loop: start=0, step=1, limit=4
    $region2: #{tpu_custom_call.1} parent=1 // loop_pre_header
      _
    $region3: #{tpu_custom_call.1} parent=1 // loop_header
      %s23 = sphi 0, %s27
      %p24 = scmp.ge.s32.totalorder %s23, 4
      %s33 = sphi 0, %s35
      %s36 = sphi 0, %s33
      %s37 = sphi 0, %s36
      %s53 = sphi 0, %s37
      %s59 = sphi 0, %s61
      %s62 = sphi 0, %s59
      %s63 = sphi 0, %s62
      %s79 = sphi 0, %s63
      %s85 = sphi 0, %s87
      %s88 = sphi 0, %s85
      %s89 = sphi 0, %s88
      %s105 = sphi 0, %s89
      %s111 = sphi 0, %s113
      %s114 = sphi 0, %s111
      %s115 = sphi 0, %s114
      %s131 = sphi 0, %s115
      %s135 = sphi 0, %s135
      %s137 = sphi 0, %s135
      %s138 = sphi 0, %s137
      %s152 = sphi 0, %s138
      %s156 = sphi 0, %s156
      %s158 = sphi 0, %s156
      %s159 = sphi 0, %s158
      %s173 = sphi 0, %s159
      %s177 = sphi 0, %s177
      %s179 = sphi 0, %s177
      %s180 = sphi 0, %s179
      %s194 = sphi 0, %s180
      %s198 = sphi 0, %s198
      %s200 = sphi 0, %s198
      %s201 = sphi 0, %s200
      %s215 = sphi 0, %s201
      %s219 = sphi 0, %s219
      %s221 = sphi 0, %s219
      %s222 = sphi 0, %s221
      %s236 = sphi 0, %s222
      %s240 = sphi 0, %s240
      %s242 = sphi 0, %s240
      %s243 = sphi 0, %s242
      %s257 = sphi 0, %s243
      %s261 = sphi 0, %s261
      %s263 = sphi 0, %s261
      %s264 = sphi 0, %s263
      %s278 = sphi 0, %s264
      %s282 = sphi 0, %s282
      %s284 = sphi 0, %s282
      %s285 = sphi 0, %s284
      %s299 = sphi 0, %s285
      %s303 = sphi 0, %s303
      %s305 = sphi 0, %s303
      %s306 = sphi 0, %s305
      %s320 = sphi 0, %s306
      %s324 = sphi 0, %s324
      %s326 = sphi 0, %s324
      %s327 = sphi 0, %s326
      %s341 = sphi 0, %s327
      %s347 = sphi 0, %s349
      %s350 = sphi 0, %s347
      %s351 = sphi 0, %s350
      %s367 = sphi 0, %s351
    $region4: #{tpu_custom_call.1} parent=1 // loop_header_branch
      %26 = sbr.rel (%p24) target = $region8
    $region5: #{tpu_custom_call.1} parent=1 // loop_body
      %s28 = ssub.s32 %s23, 1
      %s29 = ssub.s32 %s23, 2
      %s30 = sadd.s32 %s23, 1
      %s31 = ssub.s32 %s23, %s30
      %p32 = scmp.eq.s32.totalorder %s31, 0
      %s34 = sadd.s32 %s33, 1
      %s35 = scalar_select %p32, %s33, %s34
      %p38 = pneg %p32
      %p39 = scmp.eq.s32.totalorder %s23, 1
      %p40 = por %p38, %p39
      %p41 = scmp.ne.s32.totalorder %s33, %s36
      %p42 = scmp.eq.s32.totalorder %s23, 0
      %p43 = por %p41, %p42
      %p44 = scmp.ne.s32.totalorder %s33, %s36
      %p45 = scmp.eq.s32.totalorder %s28, 1
      %p46 = por %p44, %p45
      %p47 = scmp.ne.s32.totalorder %s36, %s37
      %p48 = scmp.eq.s32.totalorder %s28, 0
      %p49 = por %p47, %p48
      %p50 = scmp.ne.s32.totalorder %s36, %s37
      %p51 = scmp.eq.s32.totalorder %s29, 1
      %p52 = por %p50, %p51
      %p54 = scmp.ne.s32.totalorder %s37, %s53
      %p55 = scmp.eq.s32.totalorder %s29, 0
      %p56 = por %p54, %p55
      %s57 = ssub.s32 %s23, %s30
      %p58 = scmp.eq.s32.totalorder %s57, 0
      %s60 = sadd.s32 %s59, 1
      %s61 = scalar_select %p58, %s59, %s60
      %p64 = pneg %p58
      %p65 = scmp.eq.s32.totalorder %s23, 1
      %p66 = por %p64, %p65
      %p67 = scmp.ne.s32.totalorder %s59, %s62
      %p68 = scmp.eq.s32.totalorder %s23, 0
      %p69 = por %p67, %p68
      %p70 = scmp.ne.s32.totalorder %s59, %s62
      %p71 = scmp.eq.s32.totalorder %s28, 1
      %p72 = por %p70, %p71
      %p73 = scmp.ne.s32.totalorder %s62, %s63
      %p74 = scmp.eq.s32.totalorder %s28, 0
      %p75 = por %p73, %p74
      %p76 = scmp.ne.s32.totalorder %s62, %s63
      %p77 = scmp.eq.s32.totalorder %s29, 1
      %p78 = por %p76, %p77
      %p80 = scmp.ne.s32.totalorder %s63, %s79
      %p81 = scmp.eq.s32.totalorder %s29, 0
      %p82 = por %p80, %p81
      %s83 = ssub.s32 %s23, %s30
      %p84 = scmp.eq.s32.totalorder %s83, 0
      %s86 = sadd.s32 %s85, 1
      %s87 = scalar_select %p84, %s85, %s86
      %p90 = pneg %p84
      %p91 = scmp.eq.s32.totalorder %s23, 1
      %p92 = por %p90, %p91
      %p93 = scmp.ne.s32.totalorder %s85, %s88
      %p94 = scmp.eq.s32.totalorder %s23, 0
      %p95 = por %p93, %p94
      %p96 = scmp.ne.s32.totalorder %s85, %s88
      %p97 = scmp.eq.s32.totalorder %s28, 1
      %p98 = por %p96, %p97
      %p99 = scmp.ne.s32.totalorder %s88, %s89
      %p100 = scmp.eq.s32.totalorder %s28, 0
      %p101 = por %p99, %p100
      %p102 = scmp.ne.s32.totalorder %s88, %s89
      %p103 = scmp.eq.s32.totalorder %s29, 1
      %p104 = por %p102, %p103
      %p106 = scmp.ne.s32.totalorder %s89, %s105
      %p107 = scmp.eq.s32.totalorder %s29, 0
      %p108 = por %p106, %p107
      %s109 = ssub.s32 %s23, %s30
      %p110 = scmp.eq.s32.totalorder %s109, 0
      %s112 = sadd.s32 %s111, 1
      %s113 = scalar_select %p110, %s111, %s112
      %p116 = pneg %p110
      %p117 = scmp.eq.s32.totalorder %s23, 1
      %p118 = por %p116, %p117
      %p119 = scmp.ne.s32.totalorder %s111, %s114
      %p120 = scmp.eq.s32.totalorder %s23, 0
      %p121 = por %p119, %p120
      %p122 = scmp.ne.s32.totalorder %s111, %s114
      %p123 = scmp.eq.s32.totalorder %s28, 1
      %p124 = por %p122, %p123
      %p125 = scmp.ne.s32.totalorder %s114, %s115
      %p126 = scmp.eq.s32.totalorder %s28, 0
      %p127 = por %p125, %p126
      %p128 = scmp.ne.s32.totalorder %s114, %s115
      %p129 = scmp.eq.s32.totalorder %s29, 1
      %p130 = por %p128, %p129
      %p132 = scmp.ne.s32.totalorder %s115, %s131
      %p133 = scmp.eq.s32.totalorder %s29, 0
      %p134 = por %p132, %p133
      %s136 = sadd.s32 %s135, 1
      %p139 = scmp.eq.s32.totalorder %s23, 1
      %p140 = scmp.ne.s32.totalorder %s135, %s137
      %p141 = scmp.eq.s32.totalorder %s23, 0
      %p142 = por %p140, %p141
      %p143 = scmp.ne.s32.totalorder %s135, %s137
      %p144 = scmp.eq.s32.totalorder %s28, 1
      %p145 = por %p143, %p144
      %p146 = scmp.ne.s32.totalorder %s137, %s138
      %p147 = scmp.eq.s32.totalorder %s28, 0
      %p148 = por %p146, %p147
      %p149 = scmp.ne.s32.totalorder %s137, %s138
      %p150 = scmp.eq.s32.totalorder %s29, 1
      %p151 = por %p149, %p150
      %p153 = scmp.ne.s32.totalorder %s138, %s152
      %p154 = scmp.eq.s32.totalorder %s29, 0
      %p155 = por %p153, %p154
      %s157 = sadd.s32 %s156, 1
      %p160 = scmp.eq.s32.totalorder %s23, 1
      %p161 = scmp.ne.s32.totalorder %s156, %s158
      %p162 = scmp.eq.s32.totalorder %s23, 0
      %p163 = por %p161, %p162
      %p164 = scmp.ne.s32.totalorder %s156, %s158
      %p165 = scmp.eq.s32.totalorder %s28, 1
      %p166 = por %p164, %p165
      %p167 = scmp.ne.s32.totalorder %s158, %s159
      %p168 = scmp.eq.s32.totalorder %s28, 0
      %p169 = por %p167, %p168
      %p170 = scmp.ne.s32.totalorder %s158, %s159
      %p171 = scmp.eq.s32.totalorder %s29, 1
      %p172 = por %p170, %p171
      %p174 = scmp.ne.s32.totalorder %s159, %s173
      %p175 = scmp.eq.s32.totalorder %s29, 0
      %p176 = por %p174, %p175
      %s178 = sadd.s32 %s177, 1
      %p181 = scmp.eq.s32.totalorder %s23, 1
      %p182 = scmp.ne.s32.totalorder %s177, %s179
      %p183 = scmp.eq.s32.totalorder %s23, 0
      %p184 = por %p182, %p183
      %p185 = scmp.ne.s32.totalorder %s177, %s179
      %p186 = scmp.eq.s32.totalorder %s28, 1
      %p187 = por %p185, %p186
      %p188 = scmp.ne.s32.totalorder %s179, %s180
      %p189 = scmp.eq.s32.totalorder %s28, 0
      %p190 = por %p188, %p189
      %p191 = scmp.ne.s32.totalorder %s179, %s180
      %p192 = scmp.eq.s32.totalorder %s29, 1
      %p193 = por %p191, %p192
      %p195 = scmp.ne.s32.totalorder %s180, %s194
      %p196 = scmp.eq.s32.totalorder %s29, 0
      %p197 = por %p195, %p196
      %s199 = sadd.s32 %s198, 1
      %p202 = scmp.eq.s32.totalorder %s23, 1
      %p203 = scmp.ne.s32.totalorder %s198, %s200
      %p204 = scmp.eq.s32.totalorder %s23, 0
      %p205 = por %p203, %p204
      %p206 = scmp.ne.s32.totalorder %s198, %s200
      %p207 = scmp.eq.s32.totalorder %s28, 1
      %p208 = por %p206, %p207
      %p209 = scmp.ne.s32.totalorder %s200, %s201
      %p210 = scmp.eq.s32.totalorder %s28, 0
      %p211 = por %p209, %p210
      %p212 = scmp.ne.s32.totalorder %s200, %s201
      %p213 = scmp.eq.s32.totalorder %s29, 1
      %p214 = por %p212, %p213
      %p216 = scmp.ne.s32.totalorder %s201, %s215
      %p217 = scmp.eq.s32.totalorder %s29, 0
      %p218 = por %p216, %p217
      %s220 = sadd.s32 %s219, 1
      %p223 = scmp.eq.s32.totalorder %s23, 1
      %p224 = scmp.ne.s32.totalorder %s219, %s221
      %p225 = scmp.eq.s32.totalorder %s23, 0
      %p226 = por %p224, %p225
      %p227 = scmp.ne.s32.totalorder %s219, %s221
      %p228 = scmp.eq.s32.totalorder %s28, 1
      %p229 = por %p227, %p228
      %p230 = scmp.ne.s32.totalorder %s221, %s222
      %p231 = scmp.eq.s32.totalorder %s28, 0
      %p232 = por %p230, %p231
      %p233 = scmp.ne.s32.totalorder %s221, %s222
      %p234 = scmp.eq.s32.totalorder %s29, 1
      %p235 = por %p233, %p234
      %p237 = scmp.ne.s32.totalorder %s222, %s236
      %p238 = scmp.eq.s32.totalorder %s29, 0
      %p239 = por %p237, %p238
      %s241 = sadd.s32 %s240, 1
      %p244 = scmp.eq.s32.totalorder %s23, 1
      %p245 = scmp.ne.s32.totalorder %s240, %s242
      %p246 = scmp.eq.s32.totalorder %s23, 0
      %p247 = por %p245, %p246
      %p248 = scmp.ne.s32.totalorder %s240, %s242
      %p249 = scmp.eq.s32.totalorder %s28, 1
      %p250 = por %p248, %p249
      %p251 = scmp.ne.s32.totalorder %s242, %s243
      %p252 = scmp.eq.s32.totalorder %s28, 0
      %p253 = por %p251, %p252
      %p254 = scmp.ne.s32.totalorder %s242, %s243
      %p255 = scmp.eq.s32.totalorder %s29, 1
      %p256 = por %p254, %p255
      %p258 = scmp.ne.s32.totalorder %s243, %s257
      %p259 = scmp.eq.s32.totalorder %s29, 0
      %p260 = por %p258, %p259
      %s262 = sadd.s32 %s261, 1
      %p265 = scmp.eq.s32.totalorder %s23, 1
      %p266 = scmp.ne.s32.totalorder %s261, %s263
      %p267 = scmp.eq.s32.totalorder %s23, 0
      %p268 = por %p266, %p267
      %p269 = scmp.ne.s32.totalorder %s261, %s263
      %p270 = scmp.eq.s32.totalorder %s28, 1
      %p271 = por %p269, %p270
      %p272 = scmp.ne.s32.totalorder %s263, %s264
      %p273 = scmp.eq.s32.totalorder %s28, 0
      %p274 = por %p272, %p273
      %p275 = scmp.ne.s32.totalorder %s263, %s264
      %p276 = scmp.eq.s32.totalorder %s29, 1
      %p277 = por %p275, %p276
      %p279 = scmp.ne.s32.totalorder %s264, %s278
      %p280 = scmp.eq.s32.totalorder %s29, 0
      %p281 = por %p279, %p280
      %s283 = sadd.s32 %s282, 1
      %p286 = scmp.eq.s32.totalorder %s23, 1
      %p287 = scmp.ne.s32.totalorder %s282, %s284
      %p288 = scmp.eq.s32.totalorder %s23, 0
      %p289 = por %p287, %p288
      %p290 = scmp.ne.s32.totalorder %s282, %s284
      %p291 = scmp.eq.s32.totalorder %s28, 1
      %p292 = por %p290, %p291
      %p293 = scmp.ne.s32.totalorder %s284, %s285
      %p294 = scmp.eq.s32.totalorder %s28, 0
      %p295 = por %p293, %p294
      %p296 = scmp.ne.s32.totalorder %s284, %s285
      %p297 = scmp.eq.s32.totalorder %s29, 1
      %p298 = por %p296, %p297
      %p300 = scmp.ne.s32.totalorder %s285, %s299
      %p301 = scmp.eq.s32.totalorder %s29, 0
      %p302 = por %p300, %p301
      %s304 = sadd.s32 %s303, 1
      %p307 = scmp.eq.s32.totalorder %s23, 1
      %p308 = scmp.ne.s32.totalorder %s303, %s305
      %p309 = scmp.eq.s32.totalorder %s23, 0
      %p310 = por %p308, %p309
      %p311 = scmp.ne.s32.totalorder %s303, %s305
      %p312 = scmp.eq.s32.totalorder %s28, 1
      %p313 = por %p311, %p312
      %p314 = scmp.ne.s32.totalorder %s305, %s306
      %p315 = scmp.eq.s32.totalorder %s28, 0
      %p316 = por %p314, %p315
      %p317 = scmp.ne.s32.totalorder %s305, %s306
      %p318 = scmp.eq.s32.totalorder %s29, 1
      %p319 = por %p317, %p318
      %p321 = scmp.ne.s32.totalorder %s306, %s320
      %p322 = scmp.eq.s32.totalorder %s29, 0
      %p323 = por %p321, %p322
      %s325 = sadd.s32 %s324, 1
      %p328 = scmp.eq.s32.totalorder %s23, 1
      %p329 = scmp.ne.s32.totalorder %s324, %s326
      %p330 = scmp.eq.s32.totalorder %s23, 0
      %p331 = por %p329, %p330
      %p332 = scmp.ne.s32.totalorder %s324, %s326
      %p333 = scmp.eq.s32.totalorder %s28, 1
      %p334 = por %p332, %p333
      %p335 = scmp.ne.s32.totalorder %s326, %s327
      %p336 = scmp.eq.s32.totalorder %s28, 0
      %p337 = por %p335, %p336
      %p338 = scmp.ne.s32.totalorder %s326, %s327
      %p339 = scmp.eq.s32.totalorder %s29, 1
      %p340 = por %p338, %p339
      %p342 = scmp.ne.s32.totalorder %s327, %s341
      %p343 = scmp.eq.s32.totalorder %s29, 0
      %p344 = por %p342, %p343
      %s345 = ssub.s32 %s23, %s30
      %p346 = scmp.eq.s32.totalorder %s345, 0
      %s348 = sadd.s32 %s347, 1
      %s349 = scalar_select %p346, %s347, %s348
      %p352 = pneg %p346
      %p353 = scmp.eq.s32.totalorder %s23, 1
      %p354 = por %p352, %p353
      %p355 = scmp.ne.s32.totalorder %s347, %s350
      %p356 = scmp.eq.s32.totalorder %s23, 0
      %p357 = por %p355, %p356
      %p358 = scmp.ne.s32.totalorder %s347, %s350
      %p359 = scmp.eq.s32.totalorder %s28, 1
      %p360 = por %p358, %p359
      %p361 = scmp.ne.s32.totalorder %s350, %s351
      %p362 = scmp.eq.s32.totalorder %s28, 0
      %p363 = por %p361, %p362
      %p364 = scmp.ne.s32.totalorder %s350, %s351
      %p365 = scmp.eq.s32.totalorder %s29, 1
      %p366 = por %p364, %p365
      %p368 = scmp.ne.s32.totalorder %s351, %s367
      %p369 = scmp.eq.s32.totalorder %s29, 0
      %p370 = por %p368, %p369
      %p371 = scmp.le.s32.totalorder 1, %s23
      %p372 = scmp.lt.s32.totalorder %s23, 3
      %p373 = pnand %p371, %p372
      %p374 = pneg %p373
      // Predicated region
      $region9: #{tpu_custom_call.1} parent=5 // pred_check
        _
      $region10: #{tpu_custom_call.1} parent=5 // pred_check_branch
        %376 = sbr.rel (%p373) target = $region12
      $region11: #{tpu_custom_call.1} parent=5 // pred_region
        %s377 = ssub.s32 %s23, 1
        // Predicated region
        $region13: #{tpu_custom_call.1} parent=11 // pred_check
          %p378 = pneg %p148
        $region14: #{tpu_custom_call.1} parent=11 // pred_check_branch
          %380 = sbr.rel (%p378) target = $region16
        $region15: #{tpu_custom_call.1} parent=11 // pred_region
          _
        $region16: #{tpu_custom_call.1} parent=11 // pred_fallthru
          _
        // Predicated region
        $region17: #{tpu_custom_call.1} parent=11 // pred_check
          %p381 = pneg %p169
        $region18: #{tpu_custom_call.1} parent=11 // pred_check_branch
          %383 = sbr.rel (%p381) target = $region20
        $region19: #{tpu_custom_call.1} parent=11 // pred_region
          _
        $region20: #{tpu_custom_call.1} parent=11 // pred_fallthru
          _
        // Predicated region
        $region21: #{tpu_custom_call.1} parent=11 // pred_check
          %p384 = pneg %p190
        $region22: #{tpu_custom_call.1} parent=11 // pred_check_branch
          %386 = sbr.rel (%p384) target = $region24
        $region23: #{tpu_custom_call.1} parent=11 // pred_region
          _
        $region24: #{tpu_custom_call.1} parent=11 // pred_fallthru
          _
        // Predicated region
        $region25: #{tpu_custom_call.1} parent=11 // pred_check
          %p387 = pneg %p211
        $region26: #{tpu_custom_call.1} parent=11 // pred_check_branch
          %389 = sbr.rel (%p387) target = $region28
        $region27: #{tpu_custom_call.1} parent=11 // pred_region
          _
        $region28: #{tpu_custom_call.1} parent=11 // pred_fallthru
          _
        // Predicated region
        $region29: #{tpu_custom_call.1} parent=11 // pred_check
          %p390 = pneg %p232
        $region30: #{tpu_custom_call.1} parent=11 // pred_check_branch
          %392 = sbr.rel (%p390) target = $region32
        $region31: #{tpu_custom_call.1} parent=11 // pred_region
          _
        $region32: #{tpu_custom_call.1} parent=11 // pred_fallthru
          _
        // Predicated region
        $region33: #{tpu_custom_call.1} parent=11 // pred_check
          %p393 = pneg %p253
        $region34: #{tpu_custom_call.1} parent=11 // pred_check_branch
          %395 = sbr.rel (%p393) target = $region36
        $region35: #{tpu_custom_call.1} parent=11 // pred_region
          _
        $region36: #{tpu_custom_call.1} parent=11 // pred_fallthru
          _
        // Predicated region
        $region37: #{tpu_custom_call.1} parent=11 // pred_check
          %p396 = pneg %p274
        $region38: #{tpu_custom_call.1} parent=11 // pred_check_branch
          %398 = sbr.rel (%p396) target = $region40
        $region39: #{tpu_custom_call.1} parent=11 // pred_region
          _
        $region40: #{tpu_custom_call.1} parent=11 // pred_fallthru
          _
        // Predicated region
        $region41: #{tpu_custom_call.1} parent=11 // pred_check
          %p399 = pneg %p295
        $region42: #{tpu_custom_call.1} parent=11 // pred_check_branch
          %401 = sbr.rel (%p399) target = $region44
        $region43: #{tpu_custom_call.1} parent=11 // pred_region
          _
        $region44: #{tpu_custom_call.1} parent=11 // pred_fallthru
          _
        // Predicated region
        $region45: #{tpu_custom_call.1} parent=11 // pred_check
          %p402 = pneg %p316
        $region46: #{tpu_custom_call.1} parent=11 // pred_check_branch
          %404 = sbr.rel (%p402) target = $region48
        $region47: #{tpu_custom_call.1} parent=11 // pred_region
          _
        $region48: #{tpu_custom_call.1} parent=11 // pred_fallthru
          _
        // Predicated region
        $region49: #{tpu_custom_call.1} parent=11 // pred_check
          %p405 = pneg %p337
        $region50: #{tpu_custom_call.1} parent=11 // pred_check_branch
          %407 = sbr.rel (%p405) target = $region52
        $region51: #{tpu_custom_call.1} parent=11 // pred_region
          _
        $region52: #{tpu_custom_call.1} parent=11 // pred_fallthru
          _
      $region12: #{tpu_custom_call.1} parent=5 // pred_fallthru
        _
      %p408 = scmp.lt.s32.totalorder %s23, 2
      // Predicated region
      $region53: #{tpu_custom_call.1} parent=5 // pred_check
        %p409 = pneg %p408
      $region54: #{tpu_custom_call.1} parent=5 // pred_check_branch
        %411 = sbr.rel (%p409) target = $region56
      $region55: #{tpu_custom_call.1} parent=5 // pred_region
        // Predicated region
        $region57: #{tpu_custom_call.1} parent=55 // pred_check
          %p412 = pneg %p43
        $region58: #{tpu_custom_call.1} parent=55 // pred_check_branch
          %414 = sbr.rel (%p412) target = $region60
        $region59: #{tpu_custom_call.1} parent=55 // pred_region
          %s415 = smul.u32 24, %s23
          %p416 = scmp.lt.s32.totalorder %s415, 47
          %s417 = scalar_select %p416, %s415, 47
          %s418 = smul.addr %s417, 4
          %s419 = scalar_lea.vmem %s0, %s418
          %s420 = smul.u32 24, %s23
        $region60: #{tpu_custom_call.1} parent=55 // pred_fallthru
          _
        // Predicated region
        $region61: #{tpu_custom_call.1} parent=55 // pred_check
          %p421 = pneg %p69
        $region62: #{tpu_custom_call.1} parent=55 // pred_check_branch
          %423 = sbr.rel (%p421) target = $region64
        $region63: #{tpu_custom_call.1} parent=55 // pred_region
          %s424 = smul.u32 8, %s23
          %p425 = scmp.lt.s32.totalorder %s424, 15
          %s426 = scalar_select %p425, %s424, 15
          %s427 = smul.addr %s426, 8
          %s428 = scalar_lea.vmem %s1, %s427
          %s429 = smul.u32 8, %s23
        $region64: #{tpu_custom_call.1} parent=55 // pred_fallthru
          _
        // Predicated region
        $region65: #{tpu_custom_call.1} parent=55 // pred_check
          %p430 = pneg %p95
        $region66: #{tpu_custom_call.1} parent=55 // pred_check_branch
          %432 = sbr.rel (%p430) target = $region68
        $region67: #{tpu_custom_call.1} parent=55 // pred_region
          %p433 = scmp.lt.s32.totalorder %s23, 1
          %s434 = scalar_select %p433, %s23, 1
          %s435 = smul.addr %s434, 8
          %s436 = scalar_lea.vmem %s2, %s435
        $region68: #{tpu_custom_call.1} parent=55 // pred_fallthru
          _
        // Predicated region
        $region69: #{tpu_custom_call.1} parent=55 // pred_check
          %p437 = pneg %p121
        $region70: #{tpu_custom_call.1} parent=55 // pred_check_branch
          %439 = sbr.rel (%p437) target = $region72
        $region71: #{tpu_custom_call.1} parent=55 // pred_region
          %p440 = scmp.lt.s32.totalorder %s23, 1
          %s441 = scalar_select %p440, %s23, 1
          %s442 = smul.addr %s441, 8
          %s443 = scalar_lea.vmem %s3, %s442
        $region72: #{tpu_custom_call.1} parent=55 // pred_fallthru
          _
      $region56: #{tpu_custom_call.1} parent=5 // pred_fallthru
        _
      %p444 = scmp.le.s32.totalorder 1, %s23
      %p445 = scmp.lt.s32.totalorder %s23, 3
      %p446 = pnand %p444, %p445
      %p447 = pneg %p446
      // Predicated region
      $region73: #{tpu_custom_call.1} parent=5 // pred_check
        _
      $region74: #{tpu_custom_call.1} parent=5 // pred_check_branch
        %449 = sbr.rel (%p446) target = $region76
      $region75: #{tpu_custom_call.1} parent=5 // pred_region
        %s450 = ssub.s32 %s23, 1
        %s451 = smul.u32 24, %s28
        %p452 = scmp.lt.s32.totalorder %s451, 47
        %s453 = scalar_select %p452, %s451, 47
        %s454 = smul.addr %s453, 4
        %s455 = scalar_lea.vmem %s0, %s454
        %p456 = pneg %p49
        %p457 = pneg %p46
        %s458 = smul.u32 8, %s28
        %p459 = scmp.lt.s32.totalorder %s458, 15
        %s460 = scalar_select %p459, %s458, 15
        %s461 = smul.addr %s460, 8
        %s462 = scalar_lea.vmem %s1, %s461
        %p463 = pneg %p75
        %p464 = pneg %p72
        %p465 = scmp.lt.s32.totalorder %s28, 1
        %s466 = scalar_select %p465, %s28, 1
        %s467 = smul.addr %s466, 8
        %s468 = scalar_lea.vmem %s2, %s467
        %p469 = pneg %p101
        %p470 = pneg %p98
        %p471 = scmp.lt.s32.totalorder %s28, 1
        %s472 = scalar_select %p471, %s28, 1
        %s473 = smul.addr %s472, 8
        %s474 = scalar_lea.vmem %s3, %s473
        %p475 = pneg %p127
        %p476 = pneg %p124
        %p477 = pneg %p148
        %p478 = pneg %p145
        %p479 = pneg %p169
        %p480 = pneg %p166
        %p481 = pneg %p190
        %p482 = pneg %p187
        %p483 = pneg %p211
        %p484 = pneg %p208
        %p485 = pneg %p232
        %p486 = pneg %p229
        %p487 = pneg %p253
        %p488 = pneg %p250
        %p489 = pneg %p274
        %p490 = pneg %p271
        %p491 = pneg %p295
        %p492 = pneg %p292
        %p493 = pneg %p316
        %p494 = pneg %p313
        %p495 = pneg %p337
        %p496 = pneg %p334
        %p497 = pneg %p363
        %p498 = pneg %p360
        %s499 = sand.u32 %s350, 1
        %s500 = scalar_lea.sflag [#allocation4], %s499
        %s501 = sand.u32 %s350, 1
        %s502 = smul.addr %s501, 8
        %s503 = scalar_lea.vmem [#allocation3], %s502
        %s504 = smul.u32 24, %s28
        %p505 = scmp.lt.s32.totalorder %s504, 47
        %s506 = scalar_select %p505, %s504, 47
        %s507 = smul.addr %s506, 4
        %s508 = scalar_lea.vmem %s0, %s507
        %s509 = smul.u32 24, %s28
        %s510 = smul.u32 8, %s28
        %p511 = scmp.lt.s32.totalorder %s510, 15
        %s512 = scalar_select %p511, %s510, 15
        %s513 = smul.addr %s512, 8
        %s514 = scalar_lea.vmem %s1, %s513
        %s515 = smul.u32 8, %s28
        %p516 = scmp.lt.s32.totalorder %s28, 1
        %s517 = scalar_select %p516, %s28, 1
        %s518 = smul.addr %s517, 8
        %s519 = scalar_lea.vmem %s2, %s518
        %p520 = scmp.lt.s32.totalorder %s28, 1
        %s521 = scalar_select %p520, %s28, 1
        %s522 = smul.addr %s521, 8
        %s523 = scalar_lea.vmem %s3, %s522
        %v525 = vld [vmem:[%s508] sm:$0xf]
        %v526 = vld [vmem:[%s508 + $0x4] sm:$0xf]
        %v527 = vld [vmem:[%s508 + $0x8] sm:$0xf]
        %v528 = vld [vmem:[%s508 + $0xc] sm:$0xf]
        %v529 = vld [vmem:[%s508 + $0x10] sm:$0xf]
        %v530 = vld [vmem:[%s508 + $0x14] sm:$0xf]
        %v531 = vld [vmem:[%s508 + $0x18] sm:$0xf]
        %v532 = vld [vmem:[%s508 + $0x1c] sm:$0xf]
        %v533 = vld [vmem:[%s508 + $0x20] sm:$0xf]
        %v534 = vld [vmem:[%s508 + $0x24] sm:$0xf]
        %v535 = vld [vmem:[%s508 + $0x28] sm:$0xf]
        %v536 = vld [vmem:[%s508 + $0x2c] sm:$0xf]
        %v537 = vld [vmem:[%s508 + $0x30] sm:$0xf]
        %v538 = vld [vmem:[%s508 + $0x34] sm:$0xf]
        %v539 = vld [vmem:[%s508 + $0x38] sm:$0xf]
        %v540 = vld [vmem:[%s508 + $0x3c] sm:$0xf]
        %v541 = vld [vmem:[%s508 + $0x40] sm:$0xf]
        %v542 = vld [vmem:[%s508 + $0x44] sm:$0xf]
        %v543 = vld [vmem:[%s508 + $0x48] sm:$0xf]
        %v544 = vld [vmem:[%s508 + $0x4c] sm:$0xf]
        %v545 = vld [vmem:[%s508 + $0x50] sm:$0xf]
        %v546 = vld [vmem:[%s508 + $0x54] sm:$0xf]
        %v547 = vld [vmem:[%s508 + $0x58] sm:$0xf]
        %v548 = vld [vmem:[%s508 + $0x5c] sm:$0xf]
        %v549 = vld [vmem:[%s4] sm:$0xf]
        %v550 = vld [vmem:[%s4 + $0x4] sm:$0xf]
        %v551 = vld [vmem:[%s4 + $0x8] sm:$0xf]
        %v552 = vld [vmem:[%s4 + $0xc] sm:$0xf]
        %v553 = vld [vmem:[%s6] sm:$0x1]
        %v555 = vlaneseq
        %v556 = vshrl.u32 %v555, 7
        %v557 = vsub.s32 0, %v556
        %v558 = vrot.slane %v553, %v557
        %v584 = vunpack.c.l.b16 %v525
        %v585 = vunpack.c.l.b16 %v526
        %v586 = vunpack.c.l.b16 %v527
        %v587 = vunpack.c.l.b16 %v528
        %v588 = vunpack.c.l.b16 %v529
        %v589 = vunpack.c.l.b16 %v530
        %v590 = vunpack.c.l.b16 %v531
        %v591 = vunpack.c.l.b16 %v532
        %v592 = vunpack.c.l.b16 %v533
        %v593 = vunpack.c.l.b16 %v534
        %v594 = vunpack.c.l.b16 %v535
        %v595 = vunpack.c.l.b16 %v536
        %v596 = vunpack.c.l.b16 %v537
        %v597 = vunpack.c.l.b16 %v538
        %v598 = vunpack.c.l.b16 %v539
        %v599 = vunpack.c.l.b16 %v540
        %v600 = vunpack.c.l.b16 %v541
        %v601 = vunpack.c.l.b16 %v542
        %v602 = vunpack.c.l.b16 %v543
        %v603 = vunpack.c.l.b16 %v544
        %v604 = vunpack.c.l.b16 %v545
        %v605 = vunpack.c.l.b16 %v546
        %v606 = vunpack.c.l.b16 %v547
        %v607 = vunpack.c.l.b16 %v548
        %v608 = vpack.c.b16 %v585, %v584
        %v609 = vpack.c.b16 %v587, %v586
        %v610 = vpack.c.b16 %v589, %v588
        %v611 = vpack.c.b16 %v591, %v590
        %v612 = vpack.c.b16 %v593, %v592
        %v613 = vpack.c.b16 %v595, %v594
        %v614 = vpack.c.b16 %v597, %v596
        %v615 = vpack.c.b16 %v599, %v598
        %v616 = vpack.c.b16 %v601, %v600
        %v617 = vpack.c.b16 %v603, %v602
        %v618 = vpack.c.b16 %v605, %v604
        %v619 = vpack.c.b16 %v607, %v606
        %v624 = vunpack.c.l.b16 %v549
        %v625 = vunpack.c.l.b16 %v550
        %v626 = vunpack.c.l.b16 %v551
        %v627 = vunpack.c.l.b16 %v552
        %v628 = vpack.c.b16 %v625, %v624
        %v629 = vpack.c.b16 %v627, %v626
        %vm632 = vcmask 261120
        %v634 = vsel %vm632, %v608, 0
        %v637 = vsel %vm632, %v609, 0
        %v640 = vsel %vm632, %v610, 0
        %v643 = vsel %vm632, %v611, 0
        %v646 = vsel %vm632, %v612, 0
        %v649 = vsel %vm632, %v613, 0
        %v652 = vsel %vm632, %v614, 0
        %v655 = vsel %vm632, %v615, 0
        %v658 = vsel %vm632, %v616, 0
        %v661 = vsel %vm632, %v617, 0
        %v664 = vsel %vm632, %v618, 0
        %v667 = vsel %vm632, %v619, 0
        %669 = vmatprep.subr.bf16.mxu0 0
        %670 = vmatpush1.bf16.msra.mxu0 %v628
        %671 = vmatprep.subr.bf16.mxu0 0
        %672 = vmatpush1.bf16.msra.mxu0 %v629
        %673 = vmatprep.subr.bf16.mxu0 0
        %674 = vmatpush1.bf16.msra.mxu0 0
        %675 = vmatprep.subr.bf16.mxu0 0
        %676 = vmatpush1.bf16.msra.mxu0 0
        %677 = vmatprep.subr.bf16.mxu0 0
        %678 = vmatpush1.bf16.msra.mxu0 0
        %679 = vmatprep.subr.bf16.mxu0 0
        %680 = vmatpush1.bf16.msra.mxu0 0
        %681 = vmatprep.subr.bf16.mxu0 0
        %682 = vmatpush1.bf16.msra.mxu0 0
        %683 = vmatprep.subr.bf16.mxu0 0
        %684 = vmatpush1.bf16.msra.mxu0 0
        %685 = vmatprep.subr.bf16.mxu0 0
        %686 = vmatpush1.bf16.msra.mxu0 0
        %687 = vmatprep.subr.bf16.mxu0 0
        %688 = vmatpush1.bf16.msra.mxu0 0
        %689 = vmatprep.subr.bf16.mxu0 0
        %690 = vmatpush1.bf16.msra.mxu0 0
        %691 = vmatprep.subr.bf16.mxu0 0
        %692 = vmatpush1.bf16.msra.mxu0 0
        %693 = vmatprep.subr.bf16.mxu0 0
        %694 = vmatpush1.bf16.msra.mxu0 0
        %695 = vmatprep.subr.bf16.mxu0 0
        %696 = vmatpush1.bf16.msra.mxu0 0
        %697 = vmatprep.subr.bf16.mxu0 0
        %698 = vmatpush1.bf16.msra.mxu0 0
        %699 = vmatprep.subr.bf16.mxu0 0
        %700 = vmatpush1.bf16.msra.mxu0 0
        %701 = vmatprep.mubr.bf16.mxu0 0
        %702 = vmatmul.mubr.bf16.gmra.mrb[0].mxu0 %v634
        %v703 = vpop.f32.mrb[0].mxu0
        %v704 = vadd.f32 %v558, %v703
        %v705 = vpop.f32.mrb[0].mxu0
        %v706 = vpop.f32.mrb[0].mxu0
        %v707 = vadd.f32 %v558, %v706
        %v708 = vpop.f32.mrb[0].mxu0
        %709 = vmatprep.mubr.bf16.mxu0 0
        %710 = vmatmul.mubr.bf16.gmra.mrb[0].mxu0 %v637
        %v711 = vpop.f32.mrb[0].mxu0
        %v712 = vadd.f32 %v558, %v711
        %v713 = vpop.f32.mrb[0].mxu0
        %v714 = vpop.f32.mrb[0].mxu0
        %v715 = vadd.f32 %v558, %v714
        %v716 = vpop.f32.mrb[0].mxu0
        %717 = vmatprep.mubr.bf16.mxu0 0
        %718 = vmatmul.mubr.bf16.gmra.mrb[0].mxu0 %v640
        %v719 = vpop.f32.mrb[0].mxu0
        %v720 = vadd.f32 %v558, %v719
        %v721 = vpop.f32.mrb[0].mxu0
        %v722 = vpop.f32.mrb[0].mxu0
        %v723 = vadd.f32 %v558, %v722
        %v724 = vpop.f32.mrb[0].mxu0
        %725 = vmatprep.mubr.bf16.mxu0 0
        %726 = vmatmul.mubr.bf16.gmra.mrb[0].mxu0 %v643
        %v727 = vpop.f32.mrb[0].mxu0
        %v728 = vadd.f32 %v558, %v727
        %v729 = vpop.f32.mrb[0].mxu0
        %v730 = vpop.f32.mrb[0].mxu0
        %v731 = vadd.f32 %v558, %v730
        %v732 = vpop.f32.mrb[0].mxu0
        %733 = vmatprep.mubr.bf16.mxu0 0
        %734 = vmatmul.mubr.bf16.gmra.mrb[0].mxu0 %v646
        %v735 = vpop.f32.mrb[0].mxu0
        %v736 = vadd.f32 %v558, %v735
        %v737 = vpop.f32.mrb[0].mxu0
        %v738 = vpop.f32.mrb[0].mxu0
        %v739 = vadd.f32 %v558, %v738
        %v740 = vpop.f32.mrb[0].mxu0
        %741 = vmatprep.mubr.bf16.mxu0 0
        %742 = vmatmul.mubr.bf16.gmra.mrb[0].mxu0 %v649
        %v743 = vpop.f32.mrb[0].mxu0
        %v744 = vadd.f32 %v558, %v743
        %v745 = vpop.f32.mrb[0].mxu0
        %v746 = vpop.f32.mrb[0].mxu0
        %v747 = vadd.f32 %v558, %v746
        %v748 = vpop.f32.mrb[0].mxu0
        %749 = vmatprep.mubr.bf16.mxu0 0
        %750 = vmatmul.mubr.bf16.gmra.mrb[0].mxu0 %v652
        %v751 = vpop.f32.mrb[0].mxu0
        %v752 = vadd.f32 %v558, %v751
        %v753 = vpop.f32.mrb[0].mxu0
        %v754 = vpop.f32.mrb[0].mxu0
        %v755 = vadd.f32 %v558, %v754
        %v756 = vpop.f32.mrb[0].mxu0
        %757 = vmatprep.mubr.bf16.mxu0 0
        %758 = vmatmul.mubr.bf16.gmra.mrb[0].mxu0 %v655
        %v759 = vpop.f32.mrb[0].mxu0
        %v760 = vadd.f32 %v558, %v759
        %v761 = vpop.f32.mrb[0].mxu0
        %v762 = vpop.f32.mrb[0].mxu0
        %v763 = vadd.f32 %v558, %v762
        %v764 = vpop.f32.mrb[0].mxu0
        %765 = vmatprep.mubr.bf16.mxu0 0
        %766 = vmatmul.mubr.bf16.gmra.mrb[0].mxu0 %v658
        %v767 = vpop.f32.mrb[0].mxu0
        %v768 = vadd.f32 %v558, %v767
        %v769 = vpop.f32.mrb[0].mxu0
        %v770 = vpop.f32.mrb[0].mxu0
        %v771 = vadd.f32 %v558, %v770
        %v772 = vpop.f32.mrb[0].mxu0
        %773 = vmatprep.mubr.bf16.mxu0 0
        %774 = vmatmul.mubr.bf16.gmra.mrb[0].mxu0 %v661
        %v775 = vpop.f32.mrb[0].mxu0
        %v776 = vadd.f32 %v558, %v775
        %v777 = vpop.f32.mrb[0].mxu0
        %v778 = vpop.f32.mrb[0].mxu0
        %v779 = vadd.f32 %v558, %v778
        %v780 = vpop.f32.mrb[0].mxu0
        %781 = vmatprep.mubr.bf16.mxu0 0
        %782 = vmatmul.mubr.bf16.gmra.mrb[0].mxu0 %v664
        %v783 = vpop.f32.mrb[0].mxu0
        %v784 = vadd.f32 %v558, %v783
        %v785 = vpop.f32.mrb[0].mxu0
        %v786 = vpop.f32.mrb[0].mxu0
        %v787 = vadd.f32 %v558, %v786
        %v788 = vpop.f32.mrb[0].mxu0
        %789 = vmatprep.mubr.bf16.mxu0 0
        %790 = vmatmul.mubr.bf16.gmra.mrb[0].mxu0 %v667
        %v791 = vpop.f32.mrb[0].mxu0
        %v792 = vadd.f32 %v558, %v791
        %v793 = vpop.f32.mrb[0].mxu0
        %v794 = vpop.f32.mrb[0].mxu0
        %v795 = vadd.f32 %v558, %v794
        %v796 = vpop.f32.mrb[0].mxu0
        %797 = vdwg.mxu0
        %798 = vst [vmem:[#allocation2] sm:$0xff] %v704
        %799 = vst [vmem:[#allocation2 + $0x8] sm:$0xff] %v707
        %800 = vst [vmem:[#allocation2 + $0x10] sm:$0xff] %v712
        %801 = vst [vmem:[#allocation2 + $0x18] sm:$0xff] %v715
        %802 = vst [vmem:[#allocation2 + $0x20] sm:$0xff] %v720
        %803 = vst [vmem:[#allocation2 + $0x28] sm:$0xff] %v723
        %804 = vst [vmem:[#allocation2 + $0x30] sm:$0xff] %v728
        %805 = vst [vmem:[#allocation2 + $0x38] sm:$0xff] %v731
        %806 = vst [vmem:[#allocation2 + $0x40] sm:$0xff] %v736
        %807 = vst [vmem:[#allocation2 + $0x48] sm:$0xff] %v739
        %808 = vst [vmem:[#allocation2 + $0x50] sm:$0xff] %v744
        %809 = vst [vmem:[#allocation2 + $0x58] sm:$0xff] %v747
        %810 = vst [vmem:[#allocation2 + $0x60] sm:$0xff] %v752
        %811 = vst [vmem:[#allocation2 + $0x68] sm:$0xff] %v755
        %812 = vst [vmem:[#allocation2 + $0x70] sm:$0xff] %v760
        %813 = vst [vmem:[#allocation2 + $0x78] sm:$0xff] %v763
        %814 = vst [vmem:[#allocation2 + $0x80] sm:$0xff] %v768
        %815 = vst [vmem:[#allocation2 + $0x88] sm:$0xff] %v771
        %816 = vst [vmem:[#allocation2 + $0x90] sm:$0xff] %v776
        %817 = vst [vmem:[#allocation2 + $0x98] sm:$0xff] %v779
        %818 = vst [vmem:[#allocation2 + $0xa0] sm:$0xff] %v784
        %819 = vst [vmem:[#allocation2 + $0xa8] sm:$0xff] %v787
        %820 = vst [vmem:[#allocation2 + $0xb0] sm:$0xff] %v792
        %821 = vst [vmem:[#allocation2 + $0xb8] sm:$0xff] %v795
        %v822 = vld [vmem:[%s514] sm:$0xff]
        %v823 = vld [vmem:[%s514 + $0x8] sm:$0xff]
        %v824 = vld [vmem:[%s514 + $0x10] sm:$0xff]
        %v825 = vld [vmem:[%s514 + $0x18] sm:$0xff]
        %v826 = vld [vmem:[%s514 + $0x20] sm:$0xff]
        %v827 = vld [vmem:[%s514 + $0x28] sm:$0xff]
        %v828 = vld [vmem:[%s514 + $0x30] sm:$0xff]
        %v829 = vld [vmem:[%s514 + $0x38] sm:$0xff]
        %v830 = vld [vmem:[%s5] sm:$0xf]
        %v831 = vld [vmem:[%s5 + $0x4] sm:$0xf]
        %v832 = vld [vmem:[%s5 + $0x8] sm:$0xf]
        %v833 = vld [vmem:[%s5 + $0xc] sm:$0xf]
        %v834 = vld [vmem:[#allocation2] sm:$0xff]
        %v835 = vld [vmem:[#allocation2 + $0x8] sm:$0xff]
        %v836 = vld [vmem:[#allocation2 + $0x10] sm:$0xff]
        %v837 = vld [vmem:[#allocation2 + $0x18] sm:$0xff]
        %v838 = vld [vmem:[#allocation2 + $0x20] sm:$0xff]
        %v839 = vld [vmem:[#allocation2 + $0x28] sm:$0xff]
        %v840 = vld [vmem:[#allocation2 + $0x30] sm:$0xff]
        %v841 = vld [vmem:[#allocation2 + $0x38] sm:$0xff]
        %v846 = vunpack.c.l.b16 %v830
        %v847 = vunpack.c.l.b16 %v831
        %v848 = vunpack.c.l.b16 %v832
        %v849 = vunpack.c.l.b16 %v833
        %v850 = vpack.c.b16 %v847, %v846
        %v851 = vpack.c.b16 %v849, %v848
        %v855 = vsel %vm632, 0, 0
        %857 = vmatprep.subr.bf16.mxu0 0
        %858 = vmatpush1.bf16.msra.mxu0 %v850
        %859 = vmatprep.subr.bf16.mxu0 0
        %860 = vmatpush1.bf16.msra.mxu0 %v851
        %861 = vmatprep.subr.bf16.mxu0 0
        %862 = vmatpush1.bf16.msra.mxu0 0
        %863 = vmatprep.subr.bf16.mxu0 0
        %864 = vmatpush1.bf16.msra.mxu0 0
        %865 = vmatprep.subr.bf16.mxu0 0
        %866 = vmatpush1.bf16.msra.mxu0 0
        %867 = vmatprep.subr.bf16.mxu0 0
        %868 = vmatpush1.bf16.msra.mxu0 0
        %869 = vmatprep.subr.bf16.mxu0 0
        %870 = vmatpush1.bf16.msra.mxu0 0
        %871 = vmatprep.subr.bf16.mxu0 0
        %872 = vmatpush1.bf16.msra.mxu0 0
        %873 = vmatprep.subr.bf16.mxu0 0
        %874 = vmatpush1.bf16.msra.mxu0 0
        %875 = vmatprep.subr.bf16.mxu0 0
        %876 = vmatpush1.bf16.msra.mxu0 0
        %877 = vmatprep.subr.bf16.mxu0 0
        %878 = vmatpush1.bf16.msra.mxu0 0
        %879 = vmatprep.subr.bf16.mxu0 0
        %880 = vmatpush1.bf16.msra.mxu0 0
        %881 = vmatprep.subr.bf16.mxu0 0
        %882 = vmatpush1.bf16.msra.mxu0 0
        %883 = vmatprep.subr.bf16.mxu0 0
        %884 = vmatpush1.bf16.msra.mxu0 0
        %885 = vmatprep.subr.bf16.mxu0 0
        %886 = vmatpush1.bf16.msra.mxu0 0
        %887 = vmatprep.subr.bf16.mxu0 0
        %888 = vmatpush1.bf16.msra.mxu0 0
        %889 = vmatprep.mubr.bf16.mxu0 0
        %890 = vmatmul.mubr.bf16.gmra.mrb[0].mxu0 %v855
        %v891 = vpop.f32.mrb[0].mxu0
        %v892 = vadd.f32 0.0, %v891
        %v893 = vpop.f32.mrb[0].mxu0
        %v894 = vpop.f32.mrb[0].mxu0
        %v895 = vadd.f32 0.0, %v894
        %v896 = vpop.f32.mrb[0].mxu0
        %897 = vmatprep.mubr.bf16.mxu0 0
        %898 = vmatmul.mubr.bf16.gmra.mrb[0].mxu0 %v855
        %v899 = vpop.f32.mrb[0].mxu0
        %v900 = vadd.f32 0.0, %v899
        %v901 = vpop.f32.mrb[0].mxu0
        %v902 = vpop.f32.mrb[0].mxu0
        %v903 = vadd.f32 0.0, %v902
        %v904 = vpop.f32.mrb[0].mxu0
        %905 = vmatprep.mubr.bf16.mxu0 0
        %906 = vmatmul.mubr.bf16.gmra.mrb[0].mxu0 %v855
        %v907 = vpop.f32.mrb[0].mxu0
        %v908 = vadd.f32 0.0, %v907
        %v909 = vpop.f32.mrb[0].mxu0
        %v910 = vpop.f32.mrb[0].mxu0
        %v911 = vadd.f32 0.0, %v910
        %v912 = vpop.f32.mrb[0].mxu0
        %913 = vmatprep.mubr.bf16.mxu0 0
        %914 = vmatmul.mubr.bf16.gmra.mrb[0].mxu0 %v855
        %v915 = vpop.f32.mrb[0].mxu0
        %v916 = vadd.f32 0.0, %v915
        %v917 = vpop.f32.mrb[0].mxu0
        %v918 = vpop.f32.mrb[0].mxu0
        %v919 = vadd.f32 0.0, %v918
        %v920 = vpop.f32.mrb[0].mxu0
        %921 = vdwg.mxu0
        %v922 = vadd.f32 %v834, %v892
        %v923 = vadd.f32 %v835, %v895
        %v924 = vadd.f32 %v836, %v900
        %v925 = vadd.f32 %v837, %v903
        %v926 = vadd.f32 %v838, %v908
        %v927 = vadd.f32 %v839, %v911
        %v928 = vadd.f32 %v840, %v916
        %v929 = vadd.f32 %v841, %v919
        %v930 = vxor.u32 %v922, 2147483648
        %v931 = vxor.u32 %v923, 2147483648
        %v932 = vxor.u32 %v924, 2147483648
        %v933 = vxor.u32 %v925, 2147483648
        %v934 = vxor.u32 %v926, 2147483648
        %v935 = vxor.u32 %v927, 2147483648
        %v936 = vxor.u32 %v928, 2147483648
        %v937 = vxor.u32 %v929, 2147483648
        %v938 = vmul.f32 %v930, 1.442695
        %v939 = vpow.pop %v938
        %v940 = vmul.f32 %v931, 1.442695
        %v941 = vpow.pop %v940
        %v942 = vmul.f32 %v932, 1.442695
        %v943 = vpow.pop %v942
        %v944 = vmul.f32 %v933, 1.442695
        %v945 = vpow.pop %v944
        %v946 = vmul.f32 %v934, 1.442695
        %v947 = vpow.pop %v946
        %v948 = vmul.f32 %v935, 1.442695
        %v949 = vpow.pop %v948
        %v950 = vmul.f32 %v936, 1.442695
        %v951 = vpow.pop %v950
        %v952 = vmul.f32 %v937, 1.442695
        %v953 = vpow.pop %v952
        %v954 = vadd.f32 %v939, 1.0
        %v955 = vadd.f32 %v941, 1.0
        %v956 = vadd.f32 %v943, 1.0
        %v957 = vadd.f32 %v945, 1.0
        %v958 = vadd.f32 %v947, 1.0
        %v959 = vadd.f32 %v949, 1.0
        %v960 = vadd.f32 %v951, 1.0
        %v961 = vadd.f32 %v953, 1.0
        %v962 = vrcp.pop %v954
        %v963 = vmul.f32 1.0, %v962
        %v964 = vrcp.pop %v955
        %v965 = vmul.f32 1.0, %v964
        %v966 = vrcp.pop %v956
        %v967 = vmul.f32 1.0, %v966
        %v968 = vrcp.pop %v957
        %v969 = vmul.f32 1.0, %v968
        %v970 = vrcp.pop %v958
        %v971 = vmul.f32 1.0, %v970
        %v972 = vrcp.pop %v959
        %v973 = vmul.f32 1.0, %v972
        %v974 = vrcp.pop %v960
        %v975 = vmul.f32 1.0, %v974
        %v976 = vrcp.pop %v961
        %v977 = vmul.f32 1.0, %v976
        %v978 = vtanh.pop %v922
        %v979 = vtanh.pop %v923
        %v980 = vtanh.pop %v924
        %v981 = vtanh.pop %v925
        %v982 = vtanh.pop %v926
        %v983 = vtanh.pop %v927
        %v984 = vtanh.pop %v928
        %v985 = vtanh.pop %v929
        %v986 = vmul.f32 %v963, 0.0
        %v987 = vmul.f32 %v965, 0.0
        %v988 = vmul.f32 %v967, 0.0
        %v989 = vmul.f32 %v969, 0.0
        %v990 = vmul.f32 %v971, 0.0
        %v991 = vmul.f32 %v973, 0.0
        %v992 = vmul.f32 %v975, 0.0
        %v993 = vmul.f32 %v977, 0.0
        %1002 = vrot.lane.b32.xlu0 %v978, 64
        %v1003 = vpop.permute.xlu0 %1002
        %1004 = vrot.lane.b32.xlu0 %v979, 64
        %v1005 = vpop.permute.xlu0 %1004
        %1006 = vrot.lane.b32.xlu0 %v980, 64
        %v1007 = vpop.permute.xlu0 %1006
        %1008 = vrot.lane.b32.xlu0 %v981, 64
        %v1009 = vpop.permute.xlu0 %1008
        %1010 = vrot.lane.b32.xlu0 %v982, 64
        %v1011 = vpop.permute.xlu0 %1010
        %1012 = vrot.lane.b32.xlu0 %v983, 64
        %v1013 = vpop.permute.xlu0 %1012
        %1014 = vrot.lane.b32.xlu0 %v984, 64
        %v1015 = vpop.permute.xlu0 %1014
        %1016 = vrot.lane.b32.xlu0 %v985, 64
        %v1017 = vpop.permute.xlu0 %1016
        %v1026 = vmul.f32 %v963, %v1003
        %v1027 = vmul.f32 %v965, %v1005
        %v1028 = vmul.f32 %v967, %v1007
        %v1029 = vmul.f32 %v969, %v1009
        %v1030 = vmul.f32 %v971, %v1011
        %v1031 = vmul.f32 %v973, %v1013
        %v1032 = vmul.f32 %v975, %v1015
        %v1033 = vmul.f32 %v977, %v1017
        %1042 = vrot.lane.b32.xlu0 %v1026, 32
        %v1043 = vpop.permute.xlu0 %1042
        %1044 = vrot.lane.b32.xlu0 %v1027, 32
        %v1045 = vpop.permute.xlu0 %1044
        %1046 = vrot.lane.b32.xlu0 %v1028, 32
        %v1047 = vpop.permute.xlu0 %1046
        %1048 = vrot.lane.b32.xlu0 %v1029, 32
        %v1049 = vpop.permute.xlu0 %1048
        %1050 = vrot.lane.b32.xlu0 %v1030, 32
        %v1051 = vpop.permute.xlu0 %1050
        %1052 = vrot.lane.b32.xlu0 %v1031, 32
        %v1053 = vpop.permute.xlu0 %1052
        %1054 = vrot.lane.b32.xlu0 %v1032, 32
        %v1055 = vpop.permute.xlu0 %1054
        %1056 = vrot.lane.b32.xlu0 %v1033, 32
        %v1057 = vpop.permute.xlu0 %1056
        %v1066 = vadd.f32 %v986, %v1043
        %v1067 = vadd.f32 %v987, %v1045
        %v1068 = vadd.f32 %v988, %v1047
        %v1069 = vadd.f32 %v989, %v1049
        %v1070 = vadd.f32 %v990, %v1051
        %v1071 = vadd.f32 %v991, %v1053
        %v1072 = vadd.f32 %v992, %v1055
        %v1073 = vadd.f32 %v993, %v1057
        %v1074 = vtanh.pop %v1066
        %v1075 = vtanh.pop %v1067
        %v1076 = vtanh.pop %v1068
        %v1077 = vtanh.pop %v1069
        %v1078 = vtanh.pop %v1070
        %v1079 = vtanh.pop %v1071
        %v1080 = vtanh.pop %v1072
        %v1081 = vtanh.pop %v1073
        %1090 = vrot.lane.b32.xlu0 %v1074, 64
        %v1091 = vpop.permute.xlu0 %1090
        %1092 = vrot.lane.b32.xlu0 %v1075, 64
        %v1093 = vpop.permute.xlu0 %1092
        %1094 = vrot.lane.b32.xlu0 %v1076, 64
        %v1095 = vpop.permute.xlu0 %1094
        %1096 = vrot.lane.b32.xlu0 %v1077, 64
        %v1097 = vpop.permute.xlu0 %1096
        %1098 = vrot.lane.b32.xlu0 %v1078, 64
        %v1099 = vpop.permute.xlu0 %1098
        %1100 = vrot.lane.b32.xlu0 %v1079, 64
        %v1101 = vpop.permute.xlu0 %1100
        %1102 = vrot.lane.b32.xlu0 %v1080, 64
        %v1103 = vpop.permute.xlu0 %1102
        %1104 = vrot.lane.b32.xlu0 %v1081, 64
        %v1105 = vpop.permute.xlu0 %1104
        %v1114 = vmul.f32 %v963, %v1091
        %v1115 = vmul.f32 %v965, %v1093
        %v1116 = vmul.f32 %v967, %v1095
        %v1117 = vmul.f32 %v969, %v1097
        %v1118 = vmul.f32 %v971, %v1099
        %v1119 = vmul.f32 %v973, %v1101
        %v1120 = vmul.f32 %v975, %v1103
        %v1121 = vmul.f32 %v977, %v1105
        %vm1122 = vcmp.gt.s32.totalorder %v822, 0
        %vm1123 = vcmp.gt.s32.totalorder %v823, 0
        %vm1124 = vcmp.gt.s32.totalorder %v824, 0
        %vm1125 = vcmp.gt.s32.totalorder %v825, 0
        %vm1126 = vcmp.gt.s32.totalorder %v826, 0
        %vm1127 = vcmp.gt.s32.totalorder %v827, 0
        %vm1128 = vcmp.gt.s32.totalorder %v828, 0
        %vm1129 = vcmp.gt.s32.totalorder %v829, 0
        %v1130 = vsel %vm1122, 1, 0
        %v1131 = vsel %vm1123, 1, 0
        %v1132 = vsel %vm1124, 1, 0
        %v1133 = vsel %vm1125, 1, 0
        %v1134 = vsel %vm1126, 1, 0
        %v1135 = vsel %vm1127, 1, 0
        %v1136 = vsel %vm1128, 1, 0
        %v1137 = vsel %vm1129, 1, 0
        %1138 = vset.pattern.permute.xlu0 0
        %1139 = vperm.xlu0 %1138, %v1130
        %v1140 = vpop.permute.xlu0 %1139
        %1141 = vset.pattern.permute.xlu0 0
        %1142 = vperm.xlu0 %1141, %v1131
        %v1143 = vpop.permute.xlu0 %1142
        %1144 = vset.pattern.permute.xlu0 0
        %1145 = vperm.xlu0 %1144, %v1132
        %v1146 = vpop.permute.xlu0 %1145
        %1147 = vset.pattern.permute.xlu0 0
        %1148 = vperm.xlu0 %1147, %v1133
        %v1149 = vpop.permute.xlu0 %1148
        %1150 = vset.pattern.permute.xlu0 0
        %1151 = vperm.xlu0 %1150, %v1134
        %v1152 = vpop.permute.xlu0 %1151
        %1153 = vset.pattern.permute.xlu0 0
        %1154 = vperm.xlu0 %1153, %v1135
        %v1155 = vpop.permute.xlu0 %1154
        %1156 = vset.pattern.permute.xlu0 0
        %1157 = vperm.xlu0 %1156, %v1136
        %v1158 = vpop.permute.xlu0 %1157
        %1159 = vset.pattern.permute.xlu0 0
        %1160 = vperm.xlu0 %1159, %v1137
        %v1161 = vpop.permute.xlu0 %1160
        %vm1162 = vcmp.eq.s32.totalorder %v1140, 1
        %vm1163 = vcmp.eq.s32.totalorder %v1143, 1
        %vm1164 = vcmp.eq.s32.totalorder %v1146, 1
        %vm1165 = vcmp.eq.s32.totalorder %v1149, 1
        %vm1166 = vcmp.eq.s32.totalorder %v1152, 1
        %vm1167 = vcmp.eq.s32.totalorder %v1155, 1
        %vm1168 = vcmp.eq.s32.totalorder %v1158, 1
        %vm1169 = vcmp.eq.s32.totalorder %v1161, 1
        %v1170 = vsel %vm1162, %v1114, 0.0
        %v1171 = vsel %vm1163, %v1115, 0.0
        %v1172 = vsel %vm1164, %v1116, 0.0
        %v1173 = vsel %vm1165, %v1117, 0.0
        %v1174 = vsel %vm1166, %v1118, 0.0
        %v1175 = vsel %vm1167, %v1119, 0.0
        %v1176 = vsel %vm1168, %v1120, 0.0
        %v1177 = vsel %vm1169, %v1121, 0.0
        %v1178 = vsel %vm1162, %v1066, 0.0
        %v1179 = vsel %vm1163, %v1067, 0.0
        %v1180 = vsel %vm1164, %v1068, 0.0
        %v1181 = vsel %vm1165, %v1069, 0.0
        %v1182 = vsel %vm1166, %v1070, 0.0
        %v1183 = vsel %vm1167, %v1071, 0.0
        %v1184 = vsel %vm1168, %v1072, 0.0
        %v1185 = vsel %vm1169, %v1073, 0.0
        %s1186 = scalar_lea.vmem [#allocation2], 64
        %v1187 = vld [vmem:[%s1186] sm:$0xff]
        %v1188 = vld [vmem:[%s1186 + $0x8] sm:$0xff]
        %v1189 = vld [vmem:[%s1186 + $0x10] sm:$0xff]
        %v1190 = vld [vmem:[%s1186 + $0x18] sm:$0xff]
        %v1191 = vld [vmem:[%s1186 + $0x20] sm:$0xff]
        %v1192 = vld [vmem:[%s1186 + $0x28] sm:$0xff]
        %v1193 = vld [vmem:[%s1186 + $0x30] sm:$0xff]
        %v1194 = vld [vmem:[%s1186 + $0x38] sm:$0xff]
        %v1195 = vpack.c.bf16 %v1171, %v1170
        %v1196 = vpack.c.bf16 %v1173, %v1172
        %v1197 = vpack.c.bf16 %v1175, %v1174
        %v1198 = vpack.c.bf16 %v1177, %v1176
        %1203 = vrot.lane.b32.xlu0 %v1195, 32
        %v1204 = vpop.permute.xlu0 %1203
        %1205 = vrot.lane.b32.xlu0 %v1196, 32
        %v1206 = vpop.permute.xlu0 %1205
        %1207 = vrot.lane.b32.xlu0 %v1197, 32
        %v1208 = vpop.permute.xlu0 %1207
        %1209 = vrot.lane.b32.xlu0 %v1198, 32
        %v1210 = vpop.permute.xlu0 %1209
        %v1212 = vsel %vm632, %v1204, 0
        %v1215 = vsel %vm632, %v1206, 0
        %v1218 = vsel %vm632, %v1208, 0
        %v1221 = vsel %vm632, %v1210, 0
        %1223 = vmatprep.subr.bf16.mxu0 0
        %1224 = vmatpush1.bf16.msra.mxu0 %v850
        %1225 = vmatprep.subr.bf16.mxu0 0
        %1226 = vmatpush1.bf16.msra.mxu0 %v851
        %1227 = vmatprep.subr.bf16.mxu0 0
        %1228 = vmatpush1.bf16.msra.mxu0 0
        %1229 = vmatprep.subr.bf16.mxu0 0
        %1230 = vmatpush1.bf16.msra.mxu0 0
        %1231 = vmatprep.subr.bf16.mxu0 0
        %1232 = vmatpush1.bf16.msra.mxu0 0
        %1233 = vmatprep.subr.bf16.mxu0 0
        %1234 = vmatpush1.bf16.msra.mxu0 0
        %1235 = vmatprep.subr.bf16.mxu0 0
        %1236 = vmatpush1.bf16.msra.mxu0 0
        %1237 = vmatprep.subr.bf16.mxu0 0
        %1238 = vmatpush1.bf16.msra.mxu0 0
        %1239 = vmatprep.subr.bf16.mxu0 0
        %1240 = vmatpush1.bf16.msra.mxu0 0
        %1241 = vmatprep.subr.bf16.mxu0 0
        %1242 = vmatpush1.bf16.msra.mxu0 0
        %1243 = vmatprep.subr.bf16.mxu0 0
        %1244 = vmatpush1.bf16.msra.mxu0 0
        %1245 = vmatprep.subr.bf16.mxu0 0
        %1246 = vmatpush1.bf16.msra.mxu0 0
        %1247 = vmatprep.subr.bf16.mxu0 0
        %1248 = vmatpush1.bf16.msra.mxu0 0
        %1249 = vmatprep.subr.bf16.mxu0 0
        %1250 = vmatpush1.bf16.msra.mxu0 0
        %1251 = vmatprep.subr.bf16.mxu0 0
        %1252 = vmatpush1.bf16.msra.mxu0 0
        %1253 = vmatprep.subr.bf16.mxu0 0
        %1254 = vmatpush1.bf16.msra.mxu0 0
        %1255 = vmatprep.mubr.bf16.mxu0 0
        %1256 = vmatmul.mubr.bf16.gmra.mrb[0].mxu0 %v1212
        %v1257 = vpop.f32.mrb[0].mxu0
        %v1258 = vadd.f32 0.0, %v1257
        %v1259 = vpop.f32.mrb[0].mxu0
        %v1260 = vpop.f32.mrb[0].mxu0
        %v1261 = vadd.f32 0.0, %v1260
        %v1262 = vpop.f32.mrb[0].mxu0
        %1263 = vmatprep.mubr.bf16.mxu0 0
        %1264 = vmatmul.mubr.bf16.gmra.mrb[0].mxu0 %v1215
        %v1265 = vpop.f32.mrb[0].mxu0
        %v1266 = vadd.f32 0.0, %v1265
        %v1267 = vpop.f32.mrb[0].mxu0
        %v1268 = vpop.f32.mrb[0].mxu0
        %v1269 = vadd.f32 0.0, %v1268
        %v1270 = vpop.f32.mrb[0].mxu0
        %1271 = vmatprep.mubr.bf16.mxu0 0
        %1272 = vmatmul.mubr.bf16.gmra.mrb[0].mxu0 %v1218
        %v1273 = vpop.f32.mrb[0].mxu0
        %v1274 = vadd.f32 0.0, %v1273
        %v1275 = vpop.f32.mrb[0].mxu0
        %v1276 = vpop.f32.mrb[0].mxu0
        %v1277 = vadd.f32 0.0, %v1276
        %v1278 = vpop.f32.mrb[0].mxu0
        %1279 = vmatprep.mubr.bf16.mxu0 0
        %1280 = vmatmul.mubr.bf16.gmra.mrb[0].mxu0 %v1221
        %v1281 = vpop.f32.mrb[0].mxu0
        %v1282 = vadd.f32 0.0, %v1281
        %v1283 = vpop.f32.mrb[0].mxu0
        %v1284 = vpop.f32.mrb[0].mxu0
        %v1285 = vadd.f32 0.0, %v1284
        %v1286 = vpop.f32.mrb[0].mxu0
        %1287 = vdwg.mxu0
        %v1288 = vadd.f32 %v1187, %v1258
        %v1289 = vadd.f32 %v1188, %v1261
        %v1290 = vadd.f32 %v1189, %v1266
        %v1291 = vadd.f32 %v1190, %v1269
        %v1292 = vadd.f32 %v1191, %v1274
        %v1293 = vadd.f32 %v1192, %v1277
        %v1294 = vadd.f32 %v1193, %v1282
        %v1295 = vadd.f32 %v1194, %v1285
        %v1296 = vxor.u32 %v1288, 2147483648
        %v1297 = vxor.u32 %v1289, 2147483648
        %v1298 = vxor.u32 %v1290, 2147483648
        %v1299 = vxor.u32 %v1291, 2147483648
        %v1300 = vxor.u32 %v1292, 2147483648
        %v1301 = vxor.u32 %v1293, 2147483648
        %v1302 = vxor.u32 %v1294, 2147483648
        %v1303 = vxor.u32 %v1295, 2147483648
        %v1304 = vmul.f32 %v1296, 1.442695
        %v1305 = vpow.pop %v1304
        %v1306 = vmul.f32 %v1297, 1.442695
        %v1307 = vpow.pop %v1306
        %v1308 = vmul.f32 %v1298, 1.442695
        %v1309 = vpow.pop %v1308
        %v1310 = vmul.f32 %v1299, 1.442695
        %v1311 = vpow.pop %v1310
        %v1312 = vmul.f32 %v1300, 1.442695
        %v1313 = vpow.pop %v1312
        %v1314 = vmul.f32 %v1301, 1.442695
        %v1315 = vpow.pop %v1314
        %v1316 = vmul.f32 %v1302, 1.442695
        %v1317 = vpow.pop %v1316
        %v1318 = vmul.f32 %v1303, 1.442695
        %v1319 = vpow.pop %v1318
        %v1320 = vadd.f32 %v1305, 1.0
        %v1321 = vadd.f32 %v1307, 1.0
        %v1322 = vadd.f32 %v1309, 1.0
        %v1323 = vadd.f32 %v1311, 1.0
        %v1324 = vadd.f32 %v1313, 1.0
        %v1325 = vadd.f32 %v1315, 1.0
        %v1326 = vadd.f32 %v1317, 1.0
        %v1327 = vadd.f32 %v1319, 1.0
        %v1328 = vrcp.pop %v1320
        %v1329 = vmul.f32 1.0, %v1328
        %v1330 = vrcp.pop %v1321
        %v1331 = vmul.f32 1.0, %v1330
        %v1332 = vrcp.pop %v1322
        %v1333 = vmul.f32 1.0, %v1332
        %v1334 = vrcp.pop %v1323
        %v1335 = vmul.f32 1.0, %v1334
        %v1336 = vrcp.pop %v1324
        %v1337 = vmul.f32 1.0, %v1336
        %v1338 = vrcp.pop %v1325
        %v1339 = vmul.f32 1.0, %v1338
        %v1340 = vrcp.pop %v1326
        %v1341 = vmul.f32 1.0, %v1340
        %v1342 = vrcp.pop %v1327
        %v1343 = vmul.f32 1.0, %v1342
        %v1344 = vtanh.pop %v1288
        %v1345 = vtanh.pop %v1289
        %v1346 = vtanh.pop %v1290
        %v1347 = vtanh.pop %v1291
        %v1348 = vtanh.pop %v1292
        %v1349 = vtanh.pop %v1293
        %v1350 = vtanh.pop %v1294
        %v1351 = vtanh.pop %v1295
        %v1352 = vmul.f32 %v1329, %v1178
        %v1353 = vmul.f32 %v1331, %v1179
        %v1354 = vmul.f32 %v1333, %v1180
        %v1355 = vmul.f32 %v1335, %v1181
        %v1356 = vmul.f32 %v1337, %v1182
        %v1357 = vmul.f32 %v1339, %v1183
        %v1358 = vmul.f32 %v1341, %v1184
        %v1359 = vmul.f32 %v1343, %v1185
        %1368 = vrot.lane.b32.xlu0 %v1344, 64
        %v1369 = vpop.permute.xlu0 %1368
        %1370 = vrot.lane.b32.xlu0 %v1345, 64
        %v1371 = vpop.permute.xlu0 %1370
        %1372 = vrot.lane.b32.xlu0 %v1346, 64
        %v1373 = vpop.permute.xlu0 %1372
        %1374 = vrot.lane.b32.xlu0 %v1347, 64
        %v1375 = vpop.permute.xlu0 %1374
        %1376 = vrot.lane.b32.xlu0 %v1348, 64
        %v1377 = vpop.permute.xlu0 %1376
        %1378 = vrot.lane.b32.xlu0 %v1349, 64
        %v1379 = vpop.permute.xlu0 %1378
        %1380 = vrot.lane.b32.xlu0 %v1350, 64
        %v1381 = vpop.permute.xlu0 %1380
        %1382 = vrot.lane.b32.xlu0 %v1351, 64
        %v1383 = vpop.permute.xlu0 %1382
        %v1392 = vmul.f32 %v1329, %v1369
        %v1393 = vmul.f32 %v1331, %v1371
        %v1394 = vmul.f32 %v1333, %v1373
        %v1395 = vmul.f32 %v1335, %v1375
        %v1396 = vmul.f32 %v1337, %v1377
        %v1397 = vmul.f32 %v1339, %v1379
        %v1398 = vmul.f32 %v1341, %v1381
        %v1399 = vmul.f32 %v1343, %v1383
        %1408 = vrot.lane.b32.xlu0 %v1392, 32
        %v1409 = vpop.permute.xlu0 %1408
        %1410 = vrot.lane.b32.xlu0 %v1393, 32
        %v1411 = vpop.permute.xlu0 %1410
        %1412 = vrot.lane.b32.xlu0 %v1394, 32
        %v1413 = vpop.permute.xlu0 %1412
        %1414 = vrot.lane.b32.xlu0 %v1395, 32
        %v1415 = vpop.permute.xlu0 %1414
        %1416 = vrot.lane.b32.xlu0 %v1396, 32
        %v1417 = vpop.permute.xlu0 %1416
        %1418 = vrot.lane.b32.xlu0 %v1397, 32
        %v1419 = vpop.permute.xlu0 %1418
        %1420 = vrot.lane.b32.xlu0 %v1398, 32
        %v1421 = vpop.permute.xlu0 %1420
        %1422 = vrot.lane.b32.xlu0 %v1399, 32
        %v1423 = vpop.permute.xlu0 %1422
        %v1432 = vadd.f32 %v1352, %v1409
        %v1433 = vadd.f32 %v1353, %v1411
        %v1434 = vadd.f32 %v1354, %v1413
        %v1435 = vadd.f32 %v1355, %v1415
        %v1436 = vadd.f32 %v1356, %v1417
        %v1437 = vadd.f32 %v1357, %v1419
        %v1438 = vadd.f32 %v1358, %v1421
        %v1439 = vadd.f32 %v1359, %v1423
        %v1440 = vtanh.pop %v1432
        %v1441 = vtanh.pop %v1433
        %v1442 = vtanh.pop %v1434
        %v1443 = vtanh.pop %v1435
        %v1444 = vtanh.pop %v1436
        %v1445 = vtanh.pop %v1437
        %v1446 = vtanh.pop %v1438
        %v1447 = vtanh.pop %v1439
        %1456 = vrot.lane.b32.xlu0 %v1440, 64
        %v1457 = vpop.permute.xlu0 %1456
        %1458 = vrot.lane.b32.xlu0 %v1441, 64
        %v1459 = vpop.permute.xlu0 %1458
        %1460 = vrot.lane.b32.xlu0 %v1442, 64
        %v1461 = vpop.permute.xlu0 %1460
        %1462 = vrot.lane.b32.xlu0 %v1443, 64
        %v1463 = vpop.permute.xlu0 %1462
        %1464 = vrot.lane.b32.xlu0 %v1444, 64
        %v1465 = vpop.permute.xlu0 %1464
        %1466 = vrot.lane.b32.xlu0 %v1445, 64
        %v1467 = vpop.permute.xlu0 %1466
        %1468 = vrot.lane.b32.xlu0 %v1446, 64
        %v1469 = vpop.permute.xlu0 %1468
        %1470 = vrot.lane.b32.xlu0 %v1447, 64
        %v1471 = vpop.permute.xlu0 %1470
        %v1480 = vmul.f32 %v1329, %v1457
        %v1481 = vmul.f32 %v1331, %v1459
        %v1482 = vmul.f32 %v1333, %v1461
        %v1483 = vmul.f32 %v1335, %v1463
        %v1484 = vmul.f32 %v1337, %v1465
        %v1485 = vmul.f32 %v1339, %v1467
        %v1486 = vmul.f32 %v1341, %v1469
        %v1487 = vmul.f32 %v1343, %v1471
        %vm1488 = vcmp.gt.s32.totalorder %v822, 1
        %vm1489 = vcmp.gt.s32.totalorder %v823, 1
        %vm1490 = vcmp.gt.s32.totalorder %v824, 1
        %vm1491 = vcmp.gt.s32.totalorder %v825, 1
        %vm1492 = vcmp.gt.s32.totalorder %v826, 1
        %vm1493 = vcmp.gt.s32.totalorder %v827, 1
        %vm1494 = vcmp.gt.s32.totalorder %v828, 1
        %vm1495 = vcmp.gt.s32.totalorder %v829, 1
        %v1496 = vsel %vm1488, 1, 0
        %v1497 = vsel %vm1489, 1, 0
        %v1498 = vsel %vm1490, 1, 0
        %v1499 = vsel %vm1491, 1, 0
        %v1500 = vsel %vm1492, 1, 0
        %v1501 = vsel %vm1493, 1, 0
        %v1502 = vsel %vm1494, 1, 0
        %v1503 = vsel %vm1495, 1, 0
        %1504 = vset.pattern.permute.xlu0 0
        %1505 = vperm.xlu0 %1504, %v1496
        %v1506 = vpop.permute.xlu0 %1505
        %1507 = vset.pattern.permute.xlu0 0
        %1508 = vperm.xlu0 %1507, %v1497
        %v1509 = vpop.permute.xlu0 %1508
        %1510 = vset.pattern.permute.xlu0 0
        %1511 = vperm.xlu0 %1510, %v1498
        %v1512 = vpop.permute.xlu0 %1511
        %1513 = vset.pattern.permute.xlu0 0
        %1514 = vperm.xlu0 %1513, %v1499
        %v1515 = vpop.permute.xlu0 %1514
        %1516 = vset.pattern.permute.xlu0 0
        %1517 = vperm.xlu0 %1516, %v1500
        %v1518 = vpop.permute.xlu0 %1517
        %1519 = vset.pattern.permute.xlu0 0
        %1520 = vperm.xlu0 %1519, %v1501
        %v1521 = vpop.permute.xlu0 %1520
        %1522 = vset.pattern.permute.xlu0 0
        %1523 = vperm.xlu0 %1522, %v1502
        %v1524 = vpop.permute.xlu0 %1523
        %1525 = vset.pattern.permute.xlu0 0
        %1526 = vperm.xlu0 %1525, %v1503
        %v1527 = vpop.permute.xlu0 %1526
        %vm1528 = vcmp.eq.s32.totalorder %v1506, 1
        %vm1529 = vcmp.eq.s32.totalorder %v1509, 1
        %vm1530 = vcmp.eq.s32.totalorder %v1512, 1
        %vm1531 = vcmp.eq.s32.totalorder %v1515, 1
        %vm1532 = vcmp.eq.s32.totalorder %v1518, 1
        %vm1533 = vcmp.eq.s32.totalorder %v1521, 1
        %vm1534 = vcmp.eq.s32.totalorder %v1524, 1
        %vm1535 = vcmp.eq.s32.totalorder %v1527, 1
        %v1536 = vsel %vm1528, %v1480, %v1170
        %v1537 = vsel %vm1529, %v1481, %v1171
        %v1538 = vsel %vm1530, %v1482, %v1172
        %v1539 = vsel %vm1531, %v1483, %v1173
        %v1540 = vsel %vm1532, %v1484, %v1174
        %v1541 = vsel %vm1533, %v1485, %v1175
        %v1542 = vsel %vm1534, %v1486, %v1176
        %v1543 = vsel %vm1535, %v1487, %v1177
        %v1544 = vsel %vm1528, %v1432, %v1178
        %v1545 = vsel %vm1529, %v1433, %v1179
        %v1546 = vsel %vm1530, %v1434, %v1180
        %v1547 = vsel %vm1531, %v1435, %v1181
        %v1548 = vsel %vm1532, %v1436, %v1182
        %v1549 = vsel %vm1533, %v1437, %v1183
        %v1550 = vsel %vm1534, %v1438, %v1184
        %v1551 = vsel %vm1535, %v1439, %v1185
        %s1552 = scalar_lea.vmem [#allocation2], 128
        %v1553 = vld [vmem:[%s1552] sm:$0xff]
        %v1554 = vld [vmem:[%s1552 + $0x8] sm:$0xff]
        %v1555 = vld [vmem:[%s1552 + $0x10] sm:$0xff]
        %v1556 = vld [vmem:[%s1552 + $0x18] sm:$0xff]
        %v1557 = vld [vmem:[%s1552 + $0x20] sm:$0xff]
        %v1558 = vld [vmem:[%s1552 + $0x28] sm:$0xff]
        %v1559 = vld [vmem:[%s1552 + $0x30] sm:$0xff]
        %v1560 = vld [vmem:[%s1552 + $0x38] sm:$0xff]
        %v1561 = vpack.c.bf16 %v1537, %v1536
        %v1562 = vpack.c.bf16 %v1539, %v1538
        %v1563 = vpack.c.bf16 %v1541, %v1540
        %v1564 = vpack.c.bf16 %v1543, %v1542
        %1569 = vrot.lane.b32.xlu0 %v1561, 32
        %v1570 = vpop.permute.xlu0 %1569
        %1571 = vrot.lane.b32.xlu0 %v1562, 32
        %v1572 = vpop.permute.xlu0 %1571
        %1573 = vrot.lane.b32.xlu0 %v1563, 32
        %v1574 = vpop.permute.xlu0 %1573
        %1575 = vrot.lane.b32.xlu0 %v1564, 32
        %v1576 = vpop.permute.xlu0 %1575
        %v1578 = vsel %vm632, %v1570, 0
        %v1581 = vsel %vm632, %v1572, 0
        %v1584 = vsel %vm632, %v1574, 0
        %v1587 = vsel %vm632, %v1576, 0
        %1589 = vmatprep.subr.bf16.mxu0 0
        %1590 = vmatpush1.bf16.msra.mxu0 %v850
        %1591 = vmatprep.subr.bf16.mxu0 0
        %1592 = vmatpush1.bf16.msra.mxu0 %v851
        %1593 = vmatprep.subr.bf16.mxu0 0
        %1594 = vmatpush1.bf16.msra.mxu0 0
        %1595 = vmatprep.subr.bf16.mxu0 0
        %1596 = vmatpush1.bf16.msra.mxu0 0
        %1597 = vmatprep.subr.bf16.mxu0 0
        %1598 = vmatpush1.bf16.msra.mxu0 0
        %1599 = vmatprep.subr.bf16.mxu0 0
        %1600 = vmatpush1.bf16.msra.mxu0 0
        %1601 = vmatprep.subr.bf16.mxu0 0
        %1602 = vmatpush1.bf16.msra.mxu0 0
        %1603 = vmatprep.subr.bf16.mxu0 0
        %1604 = vmatpush1.bf16.msra.mxu0 0
        %1605 = vmatprep.subr.bf16.mxu0 0
        %1606 = vmatpush1.bf16.msra.mxu0 0
        %1607 = vmatprep.subr.bf16.mxu0 0
        %1608 = vmatpush1.bf16.msra.mxu0 0
        %1609 = vmatprep.subr.bf16.mxu0 0
        %1610 = vmatpush1.bf16.msra.mxu0 0
        %1611 = vmatprep.subr.bf16.mxu0 0
        %1612 = vmatpush1.bf16.msra.mxu0 0
        %1613 = vmatprep.subr.bf16.mxu0 0
        %1614 = vmatpush1.bf16.msra.mxu0 0
        %1615 = vmatprep.subr.bf16.mxu0 0
        %1616 = vmatpush1.bf16.msra.mxu0 0
        %1617 = vmatprep.subr.bf16.mxu0 0
        %1618 = vmatpush1.bf16.msra.mxu0 0
        %1619 = vmatprep.subr.bf16.mxu0 0
        %1620 = vmatpush1.bf16.msra.mxu0 0
        %1621 = vmatprep.mubr.bf16.mxu0 0
        %1622 = vmatmul.mubr.bf16.gmra.mrb[0].mxu0 %v1578
        %v1623 = vpop.f32.mrb[0].mxu0
        %v1624 = vadd.f32 0.0, %v1623
        %v1625 = vpop.f32.mrb[0].mxu0
        %v1626 = vpop.f32.mrb[0].mxu0
        %v1627 = vadd.f32 0.0, %v1626
        %v1628 = vpop.f32.mrb[0].mxu0
        %1629 = vmatprep.mubr.bf16.mxu0 0
        %1630 = vmatmul.mubr.bf16.gmra.mrb[0].mxu0 %v1581
        %v1631 = vpop.f32.mrb[0].mxu0
        %v1632 = vadd.f32 0.0, %v1631
        %v1633 = vpop.f32.mrb[0].mxu0
        %v1634 = vpop.f32.mrb[0].mxu0
        %v1635 = vadd.f32 0.0, %v1634
        %v1636 = vpop.f32.mrb[0].mxu0
        %1637 = vmatprep.mubr.bf16.mxu0 0
        %1638 = vmatmul.mubr.bf16.gmra.mrb[0].mxu0 %v1584
        %v1639 = vpop.f32.mrb[0].mxu0
        %v1640 = vadd.f32 0.0, %v1639
        %v1641 = vpop.f32.mrb[0].mxu0
        %v1642 = vpop.f32.mrb[0].mxu0
        %v1643 = vadd.f32 0.0, %v1642
        %v1644 = vpop.f32.mrb[0].mxu0
        %1645 = vmatprep.mubr.bf16.mxu0 0
        %1646 = vmatmul.mubr.bf16.gmra.mrb[0].mxu0 %v1587
        %v1647 = vpop.f32.mrb[0].mxu0
        %v1648 = vadd.f32 0.0, %v1647
        %v1649 = vpop.f32.mrb[0].mxu0
        %v1650 = vpop.f32.mrb[0].mxu0
        %v1651 = vadd.f32 0.0, %v1650
        %v1652 = vpop.f32.mrb[0].mxu0
        %1653 = vdwg.mxu0
        %v1654 = vadd.f32 %v1553, %v1624
        %v1655 = vadd.f32 %v1554, %v1627
        %v1656 = vadd.f32 %v1555, %v1632
        %v1657 = vadd.f32 %v1556, %v1635
        %v1658 = vadd.f32 %v1557, %v1640
        %v1659 = vadd.f32 %v1558, %v1643
        %v1660 = vadd.f32 %v1559, %v1648
        %v1661 = vadd.f32 %v1560, %v1651
        %v1662 = vxor.u32 %v1654, 2147483648
        %v1663 = vxor.u32 %v1655, 2147483648
        %v1664 = vxor.u32 %v1656, 2147483648
        %v1665 = vxor.u32 %v1657, 2147483648
        %v1666 = vxor.u32 %v1658, 2147483648
        %v1667 = vxor.u32 %v1659, 2147483648
        %v1668 = vxor.u32 %v1660, 2147483648
        %v1669 = vxor.u32 %v1661, 2147483648
        %v1670 = vmul.f32 %v1662, 1.442695
        %v1671 = vpow.pop %v1670
        %v1672 = vmul.f32 %v1663, 1.442695
        %v1673 = vpow.pop %v1672
        %v1674 = vmul.f32 %v1664, 1.442695
        %v1675 = vpow.pop %v1674
        %v1676 = vmul.f32 %v1665, 1.442695
        %v1677 = vpow.pop %v1676
        %v1678 = vmul.f32 %v1666, 1.442695
        %v1679 = vpow.pop %v1678
        %v1680 = vmul.f32 %v1667, 1.442695
        %v1681 = vpow.pop %v1680
        %v1682 = vmul.f32 %v1668, 1.442695
        %v1683 = vpow.pop %v1682
        %v1684 = vmul.f32 %v1669, 1.442695
        %v1685 = vpow.pop %v1684
        %v1686 = vadd.f32 %v1671, 1.0
        %v1687 = vadd.f32 %v1673, 1.0
        %v1688 = vadd.f32 %v1675, 1.0
        %v1689 = vadd.f32 %v1677, 1.0
        %v1690 = vadd.f32 %v1679, 1.0
        %v1691 = vadd.f32 %v1681, 1.0
        %v1692 = vadd.f32 %v1683, 1.0
        %v1693 = vadd.f32 %v1685, 1.0
        %v1694 = vrcp.pop %v1686
        %v1695 = vmul.f32 1.0, %v1694
        %v1696 = vrcp.pop %v1687
        %v1697 = vmul.f32 1.0, %v1696
        %v1698 = vrcp.pop %v1688
        %v1699 = vmul.f32 1.0, %v1698
        %v1700 = vrcp.pop %v1689
        %v1701 = vmul.f32 1.0, %v1700
        %v1702 = vrcp.pop %v1690
        %v1703 = vmul.f32 1.0, %v1702
        %v1704 = vrcp.pop %v1691
        %v1705 = vmul.f32 1.0, %v1704
        %v1706 = vrcp.pop %v1692
        %v1707 = vmul.f32 1.0, %v1706
        %v1708 = vrcp.pop %v1693
        %v1709 = vmul.f32 1.0, %v1708
        %v1710 = vtanh.pop %v1654
        %v1711 = vtanh.pop %v1655
        %v1712 = vtanh.pop %v1656
        %v1713 = vtanh.pop %v1657
        %v1714 = vtanh.pop %v1658
        %v1715 = vtanh.pop %v1659
        %v1716 = vtanh.pop %v1660
        %v1717 = vtanh.pop %v1661
        %v1718 = vmul.f32 %v1695, %v1544
        %v1719 = vmul.f32 %v1697, %v1545
        %v1720 = vmul.f32 %v1699, %v1546
        %v1721 = vmul.f32 %v1701, %v1547
        %v1722 = vmul.f32 %v1703, %v1548
        %v1723 = vmul.f32 %v1705, %v1549
        %v1724 = vmul.f32 %v1707, %v1550
        %v1725 = vmul.f32 %v1709, %v1551
        %1734 = vrot.lane.b32.xlu0 %v1710, 64
        %v1735 = vpop.permute.xlu0 %1734
        %1736 = vrot.lane.b32.xlu0 %v1711, 64
        %v1737 = vpop.permute.xlu0 %1736
        %1738 = vrot.lane.b32.xlu0 %v1712, 64
        %v1739 = vpop.permute.xlu0 %1738
        %1740 = vrot.lane.b32.xlu0 %v1713, 64
        %v1741 = vpop.permute.xlu0 %1740
        %1742 = vrot.lane.b32.xlu0 %v1714, 64
        %v1743 = vpop.permute.xlu0 %1742
        %1744 = vrot.lane.b32.xlu0 %v1715, 64
        %v1745 = vpop.permute.xlu0 %1744
        %1746 = vrot.lane.b32.xlu0 %v1716, 64
        %v1747 = vpop.permute.xlu0 %1746
        %1748 = vrot.lane.b32.xlu0 %v1717, 64
        %v1749 = vpop.permute.xlu0 %1748
        %v1758 = vmul.f32 %v1695, %v1735
        %v1759 = vmul.f32 %v1697, %v1737
        %v1760 = vmul.f32 %v1699, %v1739
        %v1761 = vmul.f32 %v1701, %v1741
        %v1762 = vmul.f32 %v1703, %v1743
        %v1763 = vmul.f32 %v1705, %v1745
        %v1764 = vmul.f32 %v1707, %v1747
        %v1765 = vmul.f32 %v1709, %v1749
        %1774 = vrot.lane.b32.xlu0 %v1758, 32
        %v1775 = vpop.permute.xlu0 %1774
        %1776 = vrot.lane.b32.xlu0 %v1759, 32
        %v1777 = vpop.permute.xlu0 %1776
        %1778 = vrot.lane.b32.xlu0 %v1760, 32
        %v1779 = vpop.permute.xlu0 %1778
        %1780 = vrot.lane.b32.xlu0 %v1761, 32
        %v1781 = vpop.permute.xlu0 %1780
        %1782 = vrot.lane.b32.xlu0 %v1762, 32
        %v1783 = vpop.permute.xlu0 %1782
        %1784 = vrot.lane.b32.xlu0 %v1763, 32
        %v1785 = vpop.permute.xlu0 %1784
        %1786 = vrot.lane.b32.xlu0 %v1764, 32
        %v1787 = vpop.permute.xlu0 %1786
        %1788 = vrot.lane.b32.xlu0 %v1765, 32
        %v1789 = vpop.permute.xlu0 %1788
        %v1798 = vadd.f32 %v1718, %v1775
        %v1799 = vadd.f32 %v1719, %v1777
        %v1800 = vadd.f32 %v1720, %v1779
        %v1801 = vadd.f32 %v1721, %v1781
        %v1802 = vadd.f32 %v1722, %v1783
        %v1803 = vadd.f32 %v1723, %v1785
        %v1804 = vadd.f32 %v1724, %v1787
        %v1805 = vadd.f32 %v1725, %v1789
        %v1806 = vtanh.pop %v1798
        %v1807 = vtanh.pop %v1799
        %v1808 = vtanh.pop %v1800
        %v1809 = vtanh.pop %v1801
        %v1810 = vtanh.pop %v1802
        %v1811 = vtanh.pop %v1803
        %v1812 = vtanh.pop %v1804
        %v1813 = vtanh.pop %v1805
        %1822 = vrot.lane.b32.xlu0 %v1806, 64
        %v1823 = vpop.permute.xlu0 %1822
        %1824 = vrot.lane.b32.xlu0 %v1807, 64
        %v1825 = vpop.permute.xlu0 %1824
        %1826 = vrot.lane.b32.xlu0 %v1808, 64
        %v1827 = vpop.permute.xlu0 %1826
        %1828 = vrot.lane.b32.xlu0 %v1809, 64
        %v1829 = vpop.permute.xlu0 %1828
        %1830 = vrot.lane.b32.xlu0 %v1810, 64
        %v1831 = vpop.permute.xlu0 %1830
        %1832 = vrot.lane.b32.xlu0 %v1811, 64
        %v1833 = vpop.permute.xlu0 %1832
        %1834 = vrot.lane.b32.xlu0 %v1812, 64
        %v1835 = vpop.permute.xlu0 %1834
        %1836 = vrot.lane.b32.xlu0 %v1813, 64
        %v1837 = vpop.permute.xlu0 %1836
        %v1846 = vmul.f32 %v1695, %v1823
        %v1847 = vmul.f32 %v1697, %v1825
        %v1848 = vmul.f32 %v1699, %v1827
        %v1849 = vmul.f32 %v1701, %v1829
        %v1850 = vmul.f32 %v1703, %v1831
        %v1851 = vmul.f32 %v1705, %v1833
        %v1852 = vmul.f32 %v1707, %v1835
        %v1853 = vmul.f32 %v1709, %v1837
        %vm1854 = vcmp.gt.s32.totalorder %v822, 2
        %vm1855 = vcmp.gt.s32.totalorder %v823, 2
        %vm1856 = vcmp.gt.s32.totalorder %v824, 2
        %vm1857 = vcmp.gt.s32.totalorder %v825, 2
        %vm1858 = vcmp.gt.s32.totalorder %v826, 2
        %vm1859 = vcmp.gt.s32.totalorder %v827, 2
        %vm1860 = vcmp.gt.s32.totalorder %v828, 2
        %vm1861 = vcmp.gt.s32.totalorder %v829, 2
        %v1862 = vsel %vm1854, 1, 0
        %v1863 = vsel %vm1855, 1, 0
        %v1864 = vsel %vm1856, 1, 0
        %v1865 = vsel %vm1857, 1, 0
        %v1866 = vsel %vm1858, 1, 0
        %v1867 = vsel %vm1859, 1, 0
        %v1868 = vsel %vm1860, 1, 0
        %v1869 = vsel %vm1861, 1, 0
        %1870 = vset.pattern.permute.xlu0 0
        %1871 = vperm.xlu0 %1870, %v1862
        %v1872 = vpop.permute.xlu0 %1871
        %1873 = vset.pattern.permute.xlu0 0
        %1874 = vperm.xlu0 %1873, %v1863
        %v1875 = vpop.permute.xlu0 %1874
        %1876 = vset.pattern.permute.xlu0 0
        %1877 = vperm.xlu0 %1876, %v1864
        %v1878 = vpop.permute.xlu0 %1877
        %1879 = vset.pattern.permute.xlu0 0
        %1880 = vperm.xlu0 %1879, %v1865
        %v1881 = vpop.permute.xlu0 %1880
        %1882 = vset.pattern.permute.xlu0 0
        %1883 = vperm.xlu0 %1882, %v1866
        %v1884 = vpop.permute.xlu0 %1883
        %1885 = vset.pattern.permute.xlu0 0
        %1886 = vperm.xlu0 %1885, %v1867
        %v1887 = vpop.permute.xlu0 %1886
        %1888 = vset.pattern.permute.xlu0 0
        %1889 = vperm.xlu0 %1888, %v1868
        %v1890 = vpop.permute.xlu0 %1889
        %1891 = vset.pattern.permute.xlu0 0
        %1892 = vperm.xlu0 %1891, %v1869
        %v1893 = vpop.permute.xlu0 %1892
        %vm1894 = vcmp.eq.s32.totalorder %v1872, 1
        %vm1895 = vcmp.eq.s32.totalorder %v1875, 1
        %vm1896 = vcmp.eq.s32.totalorder %v1878, 1
        %vm1897 = vcmp.eq.s32.totalorder %v1881, 1
        %vm1898 = vcmp.eq.s32.totalorder %v1884, 1
        %vm1899 = vcmp.eq.s32.totalorder %v1887, 1
        %vm1900 = vcmp.eq.s32.totalorder %v1890, 1
        %vm1901 = vcmp.eq.s32.totalorder %v1893, 1
        %v1902 = vsel %vm1894, %v1846, %v1536
        %v1903 = vsel %vm1895, %v1847, %v1537
        %v1904 = vsel %vm1896, %v1848, %v1538
        %v1905 = vsel %vm1897, %v1849, %v1539
        %v1906 = vsel %vm1898, %v1850, %v1540
        %v1907 = vsel %vm1899, %v1851, %v1541
        %v1908 = vsel %vm1900, %v1852, %v1542
        %v1909 = vsel %vm1901, %v1853, %v1543
        %v1910 = vld [vmem:[%s519] sm:$0xff]
        %v1911 = vld [vmem:[%s523] sm:$0xff]
        %v1912 = vld [vmem:[%s7] sm:$0xff]
        %v1913 = vld [vmem:[%s7 + $0x8] sm:$0xff]
        %v1914 = vld [vmem:[%s7 + $0x10] sm:$0xff]
        %v1915 = vld [vmem:[%s7 + $0x18] sm:$0xff]
        %v1916 = vld [vmem:[%s10] sm:$0x1]
        %v1918 = vlaneseq
        %v1919 = vshrl.u32 %v1918, 7
        %v1920 = vsub.s32 0, %v1919
        %v1921 = vrot.slane %v1916, %v1920
        %v1924 = vsel %vm632, %v1911, 0
        %1926 = vmatprep.subr.mxu0 0.0
        %1927 = vmatpush1.msra.mxu0 %v1912
        %1928 = vmatprep.subr.mxu0 0.0
        %1929 = vmatpush1.msra.mxu0 %v1913
        %1930 = vmatprep.subr.mxu0 0.0
        %1931 = vmatpush1.msra.mxu0 %v1914
        %1932 = vmatprep.subr.mxu0 0.0
        %1933 = vmatpush1.msra.mxu0 %v1915
        %1934 = vmatprep.subr.mxu0 0.0
        %1935 = vmatpush1.msra.mxu0 0.0
        %1936 = vmatprep.subr.mxu0 0.0
        %1937 = vmatpush1.msra.mxu0 0.0
        %1938 = vmatprep.subr.mxu0 0.0
        %1939 = vmatpush1.msra.mxu0 0.0
        %1940 = vmatprep.subr.mxu0 0.0
        %1941 = vmatpush1.msra.mxu0 0.0
        %1942 = vmatprep.subr.mxu0 0.0
        %1943 = vmatpush1.msra.mxu0 0.0
        %1944 = vmatprep.subr.mxu0 0.0
        %1945 = vmatpush1.msra.mxu0 0.0
        %1946 = vmatprep.subr.mxu0 0.0
        %1947 = vmatpush1.msra.mxu0 0.0
        %1948 = vmatprep.subr.mxu0 0.0
        %1949 = vmatpush1.msra.mxu0 0.0
        %1950 = vmatprep.subr.mxu0 0.0
        %1951 = vmatpush1.msra.mxu0 0.0
        %1952 = vmatprep.subr.mxu0 0.0
        %1953 = vmatpush1.msra.mxu0 0.0
        %1954 = vmatprep.subr.mxu0 0.0
        %1955 = vmatpush1.msra.mxu0 0.0
        %1956 = vmatprep.subr.mxu0 0.0
        %1957 = vmatpush1.msra.mxu0 0.0
        %1958 = vmatprep.subr.mxu0 0.0
        %1959 = vmatpush1.msra.mxu0 0.0
        %1960 = vmatprep.subr.mxu0 0.0
        %1961 = vmatpush1.msra.mxu0 0.0
        %1962 = vmatprep.subr.mxu0 0.0
        %1963 = vmatpush1.msra.mxu0 0.0
        %1964 = vmatprep.subr.mxu0 0.0
        %1965 = vmatpush1.msra.mxu0 0.0
        %1966 = vmatprep.subr.mxu0 0.0
        %1967 = vmatpush1.msra.mxu0 0.0
        %1968 = vmatprep.subr.mxu0 0.0
        %1969 = vmatpush1.msra.mxu0 0.0
        %1970 = vmatprep.subr.mxu0 0.0
        %1971 = vmatpush1.msra.mxu0 0.0
        %1972 = vmatprep.subr.mxu0 0.0
        %1973 = vmatpush1.msra.mxu0 0.0
        %1974 = vmatprep.subr.mxu0 0.0
        %1975 = vmatpush1.msra.mxu0 0.0
        %1976 = vmatprep.subr.mxu0 0.0
        %1977 = vmatpush1.msra.mxu0 0.0
        %1978 = vmatprep.subr.mxu0 0.0
        %1979 = vmatpush1.msra.mxu0 0.0
        %1980 = vmatprep.subr.mxu0 0.0
        %1981 = vmatpush1.msra.mxu0 0.0
        %1982 = vmatprep.subr.mxu0 0.0
        %1983 = vmatpush1.msra.mxu0 0.0
        %1984 = vmatprep.subr.mxu0 0.0
        %1985 = vmatpush1.msra.mxu0 0.0
        %1986 = vmatprep.subr.mxu0 0.0
        %1987 = vmatpush1.msra.mxu0 0.0
        %1988 = vmatprep.subr.mxu0 0.0
        %1989 = vmatpush1.msra.mxu0 0.0
        %1990 = vmatprep.mubr.f32.mxu0 0.0
        %1991 = vmatmul.mubr.f32.gmra.mrb[0].mxu0 %v1924
        %v1992 = vpop.f32.mrb[0].mxu0
        %v1993 = vadd.f32 %v1921, %v1992
        %v1994 = vpop.f32.mrb[0].mxu0
        %1995 = vdwg.mxu0
        %v1996 = vpack.c.bf16 %v1903, %v1902
        %v1997 = vpack.c.bf16 %v1905, %v1904
        %v1998 = vpack.c.bf16 %v1907, %v1906
        %v1999 = vpack.c.bf16 %v1909, %v1908
        %v2000 = vld [vmem:[%s8] sm:$0xf]
        %v2001 = vld [vmem:[%s8 + $0x4] sm:$0xf]
        %v2002 = vld [vmem:[%s8 + $0x8] sm:$0xf]
        %v2003 = vld [vmem:[%s8 + $0xc] sm:$0xf]
        %v2004 = vld [vmem:[%s11] sm:$0x1]
        %v2006 = vlaneseq
        %v2007 = vshrl.u32 %v2006, 7
        %v2008 = vsub.s32 0, %v2007
        %v2009 = vrot.slane %v2004, %v2008
        %2015 = vrot.lane.b32.xlu0 %v1996, 32
        %v2016 = vpop.permute.xlu0 %2015
        %2017 = vrot.lane.b32.xlu0 %v1997, 32
        %v2018 = vpop.permute.xlu0 %2017
        %2019 = vrot.lane.b32.xlu0 %v1998, 32
        %v2020 = vpop.permute.xlu0 %2019
        %2021 = vrot.lane.b32.xlu0 %v1999, 32
        %v2022 = vpop.permute.xlu0 %2021
        %v2027 = vunpack.c.l.b16 %v2000
        %v2028 = vunpack.c.l.b16 %v2001
        %v2029 = vunpack.c.l.b16 %v2002
        %v2030 = vunpack.c.l.b16 %v2003
        %v2031 = vpack.c.b16 %v2028, %v2027
        %v2032 = vpack.c.b16 %v2030, %v2029
        %v2036 = vsel %vm632, %v2016, 0
        %v2039 = vsel %vm632, %v2018, 0
        %v2042 = vsel %vm632, %v2020, 0
        %v2045 = vsel %vm632, %v2022, 0
        %2047 = vmatprep.subr.bf16.mxu0 0
        %2048 = vmatpush1.bf16.msra.mxu0 %v2031
        %2049 = vmatprep.subr.bf16.mxu0 0
        %2050 = vmatpush1.bf16.msra.mxu0 %v2032
        %2051 = vmatprep.subr.bf16.mxu0 0
        %2052 = vmatpush1.bf16.msra.mxu0 0
        %2053 = vmatprep.subr.bf16.mxu0 0
        %2054 = vmatpush1.bf16.msra.mxu0 0
        %2055 = vmatprep.subr.bf16.mxu0 0
        %2056 = vmatpush1.bf16.msra.mxu0 0
        %2057 = vmatprep.subr.bf16.mxu0 0
        %2058 = vmatpush1.bf16.msra.mxu0 0
        %2059 = vmatprep.subr.bf16.mxu0 0
        %2060 = vmatpush1.bf16.msra.mxu0 0
        %2061 = vmatprep.subr.bf16.mxu0 0
        %2062 = vmatpush1.bf16.msra.mxu0 0
        %2063 = vmatprep.subr.bf16.mxu0 0
        %2064 = vmatpush1.bf16.msra.mxu0 0
        %2065 = vmatprep.subr.bf16.mxu0 0
        %2066 = vmatpush1.bf16.msra.mxu0 0
        %2067 = vmatprep.subr.bf16.mxu0 0
        %2068 = vmatpush1.bf16.msra.mxu0 0
        %2069 = vmatprep.subr.bf16.mxu0 0
        %2070 = vmatpush1.bf16.msra.mxu0 0
        %2071 = vmatprep.subr.bf16.mxu0 0
        %2072 = vmatpush1.bf16.msra.mxu0 0
        %2073 = vmatprep.subr.bf16.mxu0 0
        %2074 = vmatpush1.bf16.msra.mxu0 0
        %2075 = vmatprep.subr.bf16.mxu0 0
        %2076 = vmatpush1.bf16.msra.mxu0 0
        %2077 = vmatprep.subr.bf16.mxu0 0
        %2078 = vmatpush1.bf16.msra.mxu0 0
        %2079 = vmatprep.mubr.bf16.mxu0 0
        %2080 = vmatmul.mubr.bf16.gmra.mrb[0].mxu0 %v2036
        %v2081 = vpop.f32.mrb[0].mxu0
        %v2082 = vadd.f32 %v2009, %v2081
        %v2083 = vpop.f32.mrb[0].mxu0
        %v2084 = vpop.f32.mrb[0].mxu0
        %v2085 = vadd.f32 %v2009, %v2084
        %v2086 = vpop.f32.mrb[0].mxu0
        %2087 = vmatprep.mubr.bf16.mxu0 0
        %2088 = vmatmul.mubr.bf16.gmra.mrb[0].mxu0 %v2039
        %v2089 = vpop.f32.mrb[0].mxu0
        %v2090 = vadd.f32 %v2009, %v2089
        %v2091 = vpop.f32.mrb[0].mxu0
        %v2092 = vpop.f32.mrb[0].mxu0
        %v2093 = vadd.f32 %v2009, %v2092
        %v2094 = vpop.f32.mrb[0].mxu0
        %2095 = vmatprep.mubr.bf16.mxu0 0
        %2096 = vmatmul.mubr.bf16.gmra.mrb[0].mxu0 %v2042
        %v2097 = vpop.f32.mrb[0].mxu0
        %v2098 = vadd.f32 %v2009, %v2097
        %v2099 = vpop.f32.mrb[0].mxu0
        %v2100 = vpop.f32.mrb[0].mxu0
        %v2101 = vadd.f32 %v2009, %v2100
        %v2102 = vpop.f32.mrb[0].mxu0
        %2103 = vmatprep.mubr.bf16.mxu0 0
        %2104 = vmatmul.mubr.bf16.gmra.mrb[0].mxu0 %v2045
        %v2105 = vpop.f32.mrb[0].mxu0
        %v2106 = vadd.f32 %v2009, %v2105
        %v2107 = vpop.f32.mrb[0].mxu0
        %v2108 = vpop.f32.mrb[0].mxu0
        %v2109 = vadd.f32 %v2009, %v2108
        %v2110 = vpop.f32.mrb[0].mxu0
        %2111 = vdwg.mxu0
        %2120 = vrot.lane.b32.xlu0 %v1902, 32
        %v2121 = vpop.permute.xlu0 %2120
        %2122 = vrot.lane.b32.xlu0 %v1903, 32
        %v2123 = vpop.permute.xlu0 %2122
        %2124 = vrot.lane.b32.xlu0 %v1904, 32
        %v2125 = vpop.permute.xlu0 %2124
        %2126 = vrot.lane.b32.xlu0 %v1905, 32
        %v2127 = vpop.permute.xlu0 %2126
        %2128 = vrot.lane.b32.xlu0 %v1906, 32
        %v2129 = vpop.permute.xlu0 %2128
        %2130 = vrot.lane.b32.xlu0 %v1907, 32
        %v2131 = vpop.permute.xlu0 %2130
        %2132 = vrot.lane.b32.xlu0 %v1908, 32
        %v2133 = vpop.permute.xlu0 %2132
        %2134 = vrot.lane.b32.xlu0 %v1909, 32
        %v2135 = vpop.permute.xlu0 %2134
        %v2137 = vsel %vm632, %v1993, 0
        %v2139 = vsel %vm632, %v2121, 0
        %v2141 = vsel %vm632, %v2123, 0
        %v2143 = vsel %vm632, %v2125, 0
        %v2145 = vsel %vm632, %v2127, 0
        %v2147 = vsel %vm632, %v2129, 0
        %v2149 = vsel %vm632, %v2131, 0
        %v2151 = vsel %vm632, %v2133, 0
        %v2153 = vsel %vm632, %v2135, 0
        %2155 = vmatprep.subr.mxu0 0.0
        %2156 = vmatpush1.xpose.msra.mxu0 %v2139
        %2157 = vmatprep.subr.mxu0 0.0
        %2158 = vmatpush1.xpose.msra.mxu0 %v2141
        %2159 = vmatprep.subr.mxu0 0.0
        %2160 = vmatpush1.xpose.msra.mxu0 %v2143
        %2161 = vmatprep.subr.mxu0 0.0
        %2162 = vmatpush1.xpose.msra.mxu0 %v2145
        %2163 = vmatprep.subr.mxu0 0.0
        %2164 = vmatpush1.xpose.msra.mxu0 %v2147
        %2165 = vmatprep.subr.mxu0 0.0
        %2166 = vmatpush1.xpose.msra.mxu0 %v2149
        %2167 = vmatprep.subr.mxu0 0.0
        %2168 = vmatpush1.xpose.msra.mxu0 %v2151
        %2169 = vmatprep.subr.mxu0 0.0
        %2170 = vmatpush1.xpose.msra.mxu0 %v2153
        %2171 = vmatprep.subr.mxu0 0.0
        %2172 = vmatpush1.xpose.msra.mxu0 0.0
        %2173 = vmatprep.subr.mxu0 0.0
        %2174 = vmatpush1.xpose.msra.mxu0 0.0
        %2175 = vmatprep.subr.mxu0 0.0
        %2176 = vmatpush1.xpose.msra.mxu0 0.0
        %2177 = vmatprep.subr.mxu0 0.0
        %2178 = vmatpush1.xpose.msra.mxu0 0.0
        %2179 = vmatprep.subr.mxu0 0.0
        %2180 = vmatpush1.xpose.msra.mxu0 0.0
        %2181 = vmatprep.subr.mxu0 0.0
        %2182 = vmatpush1.xpose.msra.mxu0 0.0
        %2183 = vmatprep.subr.mxu0 0.0
        %2184 = vmatpush1.xpose.msra.mxu0 0.0
        %2185 = vmatprep.subr.mxu0 0.0
        %2186 = vmatpush1.xpose.msra.mxu0 0.0
        %2187 = vmatprep.subr.mxu0 0.0
        %2188 = vmatpush1.xpose.msra.mxu0 0.0
        %2189 = vmatprep.subr.mxu0 0.0
        %2190 = vmatpush1.xpose.msra.mxu0 0.0
        %2191 = vmatprep.subr.mxu0 0.0
        %2192 = vmatpush1.xpose.msra.mxu0 0.0
        %2193 = vmatprep.subr.mxu0 0.0
        %2194 = vmatpush1.xpose.msra.mxu0 0.0
        %2195 = vmatprep.subr.mxu0 0.0
        %2196 = vmatpush1.xpose.msra.mxu0 0.0
        %2197 = vmatprep.subr.mxu0 0.0
        %2198 = vmatpush1.xpose.msra.mxu0 0.0
        %2199 = vmatprep.subr.mxu0 0.0
        %2200 = vmatpush1.xpose.msra.mxu0 0.0
        %2201 = vmatprep.subr.mxu0 0.0
        %2202 = vmatpush1.xpose.msra.mxu0 0.0
        %2203 = vmatprep.subr.mxu0 0.0
        %2204 = vmatpush1.xpose.msra.mxu0 0.0
        %2205 = vmatprep.subr.mxu0 0.0
        %2206 = vmatpush1.xpose.msra.mxu0 0.0
        %2207 = vmatprep.subr.mxu0 0.0
        %2208 = vmatpush1.xpose.msra.mxu0 0.0
        %2209 = vmatprep.subr.mxu0 0.0
        %2210 = vmatpush1.xpose.msra.mxu0 0.0
        %2211 = vmatprep.subr.mxu0 0.0
        %2212 = vmatpush1.xpose.msra.mxu0 0.0
        %2213 = vmatprep.subr.mxu0 0.0
        %2214 = vmatpush1.xpose.msra.mxu0 0.0
        %2215 = vmatprep.subr.mxu0 0.0
        %2216 = vmatpush1.xpose.msra.mxu0 0.0
        %2217 = vmatprep.subr.mxu0 0.0
        %2218 = vmatpush1.xpose.msra.mxu0 0.0
        %2219 = vmatprep.mubr.f32.mxu0 0.0
        %2220 = vmatmul.mubr.f32.gmra.mrb[0].mxu0 %v2137
        %v2221 = vpop.f32.mrb[0].mxu0
        %v2222 = vadd.f32 0.0, %v2221
        %v2223 = vpop.f32.mrb[0].mxu0
        %2224 = vdwg.mxu0
        %v2225 = vlaneseq
        %v2226 = vshrl.u32 %v2225, 7
        %v2227 = vlaneseq
        %v2228 = vand.u32 %v2227, 127
        %v2229 = vmul.u32 %v2226, 8
        %vm2230 = vcmp.ge.s32.totalorder %v2228, %v2229
        %2231 = vset.pattern.permute.xlu0 0
        %2232 = vperm.xlu0 %2231, %v1910
        %v2233 = vpop.permute.xlu0 %2232
        %v2234 = vadd.s32 %v2229, %v2233
        %vm2235 = vcmp.lt.s32.totalorder %v2228, %v2234
        %vm2236 = vmand %vm2230, %vm2235
        %v2237 = vsel %vm2236, %v2222, -1e+30
        %vm2238 = vcmask 523264
        %v2239 = vsel %vm2238, %v2237, -inf
        %2240 = vmax.xlane.f32.xlu0 %v2239
        %v2241 = vpop.xlane.xlu0 %2240
        %v2242 = vsub.f32 %v2237, %v2241
        %v2243 = vmul.f32 %v2242, 1.442695
        %v2244 = vpow.pop %v2243
        %v2245 = vsel %vm2238, %v2244, 0.0
        %2246 = vadd.xlane.f32.xlu0 %v2245
        %v2247 = vpop.xlane.xlu0 %2246
        %v2248 = vrcp.pop %v2247
        %v2249 = vmul.f32 %v2244, %v2248
        %v2251 = vsel %vm2238, %v2249, 0
        %2253 = vmatprep.subr.mxu0 0.0
        %2254 = vmatpush1.msra.mxu0 %v2082
        %2255 = vmatprep.subr.mxu0 0.0
        %2256 = vmatpush1.msra.mxu0 %v2085
        %2257 = vmatprep.subr.mxu0 0.0
        %2258 = vmatpush1.msra.mxu0 %v2090
        %2259 = vmatprep.subr.mxu0 0.0
        %2260 = vmatpush1.msra.mxu0 %v2093
        %2261 = vmatprep.subr.mxu0 0.0
        %2262 = vmatpush1.msra.mxu0 %v2098
        %2263 = vmatprep.subr.mxu0 0.0
        %2264 = vmatpush1.msra.mxu0 %v2101
        %2265 = vmatprep.subr.mxu0 0.0
        %2266 = vmatpush1.msra.mxu0 %v2106
        %2267 = vmatprep.subr.mxu0 0.0
        %2268 = vmatpush1.msra.mxu0 %v2109
        %2269 = vmatprep.subr.mxu0 0.0
        %2270 = vmatpush1.msra.mxu0 0.0
        %2271 = vmatprep.subr.mxu0 0.0
        %2272 = vmatpush1.msra.mxu0 0.0
        %2273 = vmatprep.subr.mxu0 0.0
        %2274 = vmatpush1.msra.mxu0 0.0
        %2275 = vmatprep.subr.mxu0 0.0
        %2276 = vmatpush1.msra.mxu0 0.0
        %2277 = vmatprep.subr.mxu0 0.0
        %2278 = vmatpush1.msra.mxu0 0.0
        %2279 = vmatprep.subr.mxu0 0.0
        %2280 = vmatpush1.msra.mxu0 0.0
        %2281 = vmatprep.subr.mxu0 0.0
        %2282 = vmatpush1.msra.mxu0 0.0
        %2283 = vmatprep.subr.mxu0 0.0
        %2284 = vmatpush1.msra.mxu0 0.0
        %2285 = vmatprep.subr.mxu0 0.0
        %2286 = vmatpush1.msra.mxu0 0.0
        %2287 = vmatprep.subr.mxu0 0.0
        %2288 = vmatpush1.msra.mxu0 0.0
        %2289 = vmatprep.subr.mxu0 0.0
        %2290 = vmatpush1.msra.mxu0 0.0
        %2291 = vmatprep.subr.mxu0 0.0
        %2292 = vmatpush1.msra.mxu0 0.0
        %2293 = vmatprep.subr.mxu0 0.0
        %2294 = vmatpush1.msra.mxu0 0.0
        %2295 = vmatprep.subr.mxu0 0.0
        %2296 = vmatpush1.msra.mxu0 0.0
        %2297 = vmatprep.subr.mxu0 0.0
        %2298 = vmatpush1.msra.mxu0 0.0
        %2299 = vmatprep.subr.mxu0 0.0
        %2300 = vmatpush1.msra.mxu0 0.0
        %2301 = vmatprep.subr.mxu0 0.0
        %2302 = vmatpush1.msra.mxu0 0.0
        %2303 = vmatprep.subr.mxu0 0.0
        %2304 = vmatpush1.msra.mxu0 0.0
        %2305 = vmatprep.subr.mxu0 0.0
        %2306 = vmatpush1.msra.mxu0 0.0
        %2307 = vmatprep.subr.mxu0 0.0
        %2308 = vmatpush1.msra.mxu0 0.0
        %2309 = vmatprep.subr.mxu0 0.0
        %2310 = vmatpush1.msra.mxu0 0.0
        %2311 = vmatprep.subr.mxu0 0.0
        %2312 = vmatpush1.msra.mxu0 0.0
        %2313 = vmatprep.subr.mxu0 0.0
        %2314 = vmatpush1.msra.mxu0 0.0
        %2315 = vmatprep.subr.mxu0 0.0
        %2316 = vmatpush1.msra.mxu0 0.0
        %2317 = vmatprep.mubr.f32.mxu0 0.0
        %2318 = vmatmul.mubr.f32.gmra.mrb[0].mxu0 %v2251
        %v2319 = vpop.f32.mrb[0].mxu0
        %v2320 = vadd.f32 0.0, %v2319
        %v2321 = vpop.f32.mrb[0].mxu0
        %2322 = vdwg.mxu0
        %v2323 = vpack.c.bf16 %v2320, %v2320
        %v2324 = vld [vmem:[%s9] sm:$0xf]
        %v2325 = vld [vmem:[%s9 + $0x4] sm:$0xf]
        %v2326 = vld [vmem:[%s9 + $0x8] sm:$0xf]
        %v2327 = vld [vmem:[%s9 + $0xc] sm:$0xf]
        %v2328 = vld [vmem:[%s12] sm:$0x1]
        %v2330 = vlaneseq
        %v2331 = vshrl.u32 %v2330, 7
        %v2332 = vsub.s32 0, %v2331
        %v2333 = vrot.slane %v2328, %v2332
        %v2339 = vunpack.c.l.b16 %v2324
        %v2340 = vunpack.c.l.b16 %v2325
        %v2341 = vunpack.c.l.b16 %v2326
        %v2342 = vunpack.c.l.b16 %v2327
        %v2343 = vpack.c.b16 %v2340, %v2339
        %v2344 = vpack.c.b16 %v2342, %v2341
        %v2348 = vsel %vm632, %v2323, 0
        %2350 = vmatprep.subr.bf16.mxu0 0
        %2351 = vmatpush1.bf16.msra.mxu0 %v2343
        %2352 = vmatprep.subr.bf16.mxu0 0
        %2353 = vmatpush1.bf16.msra.mxu0 %v2344
        %2354 = vmatprep.subr.bf16.mxu0 0
        %2355 = vmatpush1.bf16.msra.mxu0 0
        %2356 = vmatprep.subr.bf16.mxu0 0
        %2357 = vmatpush1.bf16.msra.mxu0 0
        %2358 = vmatprep.subr.bf16.mxu0 0
        %2359 = vmatpush1.bf16.msra.mxu0 0
        %2360 = vmatprep.subr.bf16.mxu0 0
        %2361 = vmatpush1.bf16.msra.mxu0 0
        %2362 = vmatprep.subr.bf16.mxu0 0
        %2363 = vmatpush1.bf16.msra.mxu0 0
        %2364 = vmatprep.subr.bf16.mxu0 0
        %2365 = vmatpush1.bf16.msra.mxu0 0
        %2366 = vmatprep.subr.bf16.mxu0 0
        %2367 = vmatpush1.bf16.msra.mxu0 0
        %2368 = vmatprep.subr.bf16.mxu0 0
        %2369 = vmatpush1.bf16.msra.mxu0 0
        %2370 = vmatprep.subr.bf16.mxu0 0
        %2371 = vmatpush1.bf16.msra.mxu0 0
        %2372 = vmatprep.subr.bf16.mxu0 0
        %2373 = vmatpush1.bf16.msra.mxu0 0
        %2374 = vmatprep.subr.bf16.mxu0 0
        %2375 = vmatpush1.bf16.msra.mxu0 0
        %2376 = vmatprep.subr.bf16.mxu0 0
        %2377 = vmatpush1.bf16.msra.mxu0 0
        %2378 = vmatprep.subr.bf16.mxu0 0
        %2379 = vmatpush1.bf16.msra.mxu0 0
        %2380 = vmatprep.subr.bf16.mxu0 0
        %2381 = vmatpush1.bf16.msra.mxu0 0
        %2382 = vmatprep.mubr.bf16.mxu0 0
        %2383 = vmatmul.mubr.bf16.gmra.mrb[0].mxu0 %v2348
        %v2384 = vpop.f32.mrb[0].mxu0
        %v2385 = vadd.f32 %v2333, %v2384
        %v2386 = vpop.f32.mrb[0].mxu0
        %v2387 = vpop.f32.mrb[0].mxu0
        %v2388 = vpop.f32.mrb[0].mxu0
        %2389 = vdwg.mxu0
        %vm2390 = vcmp.gt.s32.totalorder %v1910, 0
        %v2391 = vld [vmem:[%s13] sm:$0x1]
        %v2392 = vsel %vm2390, 1, 0
        %2393 = vset.pattern.permute.xlu0 0
        %2394 = vperm.xlu0 %2393, %v2392
        %v2395 = vpop.permute.xlu0 %2394
        %vm2396 = vcmp.eq.s32.totalorder %v2395, 1
        %v2398 = vlaneseq
        %v2399 = vshrl.u32 %v2398, 7
        %v2400 = vsub.s32 0, %v2399
        %v2401 = vrot.slane %v2391, %v2400
        %v2403 = vsel %vm2396, %v2385, %v2401
        %2404 = vst.msk [vmem:[%s503] sm:$0xff] %vm632, %v2403
        %s2405 = sand.u32 %s350, 1
        %s2406 = scalar_lea.sflag [#allocation4], %s2405
        %s2407 = sand.u32 %s350, 1
        %s2408 = smul.addr %s2407, 8
        %s2409 = scalar_lea.vmem [#allocation3], %s2408
        // Predicated region
        $region77: #{tpu_custom_call.1} parent=75 // pred_check
          %p2410 = pneg %p360
        $region78: #{tpu_custom_call.1} parent=75 // pred_check_branch
          %2412 = sbr.rel (%p2410) target = $region80
        $region79: #{tpu_custom_call.1} parent=75 // pred_region
          %s2414 = ssub.s32 128, 128
          %2415 = vsyncadd %s2406, %s2414
          %s2416 = smul.addr %s28, 128
          %s2417 = scalar_lea.hbm %s14, %s2416
          %s2419 = sshll.u32 %s2409, 4
          %s2420 = int_to_ptr.vmem [resolvable:$true] %s2419
          %2422 = dma.vmem_to_hbm [thread:$0]  %s2420, 128, %s2417, %s2406
        $region80: #{tpu_custom_call.1} parent=75 // pred_fallthru
          _
      $region76: #{tpu_custom_call.1} parent=5 // pred_fallthru
        _
      %p2423 = scmp.le.s32.totalorder 2, %s23
      // Predicated region
      $region81: #{tpu_custom_call.1} parent=5 // pred_check
        %p2424 = pneg %p2423
      $region82: #{tpu_custom_call.1} parent=5 // pred_check_branch
        %2426 = sbr.rel (%p2424) target = $region84
      $region83: #{tpu_custom_call.1} parent=5 // pred_region
        %s2427 = ssub.s32 %s23, 2
        // Predicated region
        $region85: #{tpu_custom_call.1} parent=83 // pred_check
          %p2428 = pneg %p366
        $region86: #{tpu_custom_call.1} parent=83 // pred_check_branch
          %2430 = sbr.rel (%p2428) target = $region88
        $region87: #{tpu_custom_call.1} parent=83 // pred_region
          %s2431 = sand.u32 %s351, 1
          %s2432 = scalar_lea.sflag [#allocation4], %s2431
          %s2433 = sand.u32 %s351, 1
          %s2434 = smul.addr %s2433, 8
          %s2435 = scalar_lea.vmem [#allocation3], %s2434
          %2436 = dma.done %s2432, 128
        $region88: #{tpu_custom_call.1} parent=83 // pred_fallthru
          _
      $region84: #{tpu_custom_call.1} parent=5 // pred_fallthru
        _
    $region6: #{tpu_custom_call.1} parent=1 // loop_footer
      %s27 = sadd.s32 1, %s23
    $region7: #{tpu_custom_call.1} parent=1 // loop_footer_branch
      %22 = sbr.rel target = $region3
    $region8: #{tpu_custom_call.1} parent=1 // loop_exit
      _
    %2437 = vsyncpa [#allocation4], 1
    %s2438 = scalar_lea.sflag [#allocation4], 1
    %2439 = vsyncpa %s2438, 1

</llo_original>
